<compile_context>
chip_gen: v7x
topology: tpu7x:2x2x1
jax: 0.10.0
libtpu: 0.0.40
codegen_flags: <defaults>
</compile_context>

<pallas_src>
import functools

import jax
import jax.numpy as jnp
from jax.experimental import pallas as pl
from jax.experimental.pallas import tpu as pltpu

_LANES = 128


def _round_up(x, m):
    return ((x + m - 1) // m) * m


def _sublane(dtype):
    # Sub-32-bit dtypes pack rows along sublanes.
    return {4: 8, 2: 16, 1: 32}.get(jnp.dtype(dtype).itemsize, 8)


def _pick_row_tile(n_rows, row_bytes, sublane, target_block_bytes):
    """Row tile sized by bytes, sublane-aligned, with >= 2 grid steps if possible."""
    tm = max(sublane, (target_block_bytes // max(row_bytes, 1)) // sublane * sublane)
    if n_rows > 2 * sublane:
        # Keep at least two grid steps so both v7x TensorCores participate.
        tm = min(tm, _round_up(pl.cdiv(n_rows, 2), sublane))
    tm = min(tm, _round_up(n_rows, sublane))
    return tm


def _ln_kernel(x_ref, g_ref, b_ref, o_ref, *, eps):
    # Generic path: x_ref is a (tm, C) tile with channels on the lane dim.
    x = x_ref[...].astype(jnp.float32)                      # (tm, C)
    mean = jnp.mean(x, axis=-1, keepdims=True)              # XLU cross-lane reduce
    xc = x - mean
    var = jnp.mean(xc * xc, axis=-1, keepdims=True)         # biased, like torch
    y = xc * jax.lax.rsqrt(var + jnp.float32(eps))          # EUP rsqrt
    g = g_ref[...].astype(jnp.float32)                      # (1, C)
    b = b_ref[...].astype(jnp.float32)
    o_ref[...] = (y * g + b).astype(o_ref.dtype)


def _ln_packed_kernel(x_ref, g_ref, b_ref, s_ref, o_ref, *, c, eps):
    # Lane-dense path: x_ref is (tm, 128); each 128-lane row packs 128//c points.
    # s_ref is a (128, 128) block-diagonal ones matrix: x @ s broadcasts each
    # C-wide segment's sum to every lane of that segment (idle-MXU work).
    x = x_ref[...].astype(jnp.float32)
    s = s_ref[...]
    inv_c = jnp.float32(1.0 / c)
    mean = jnp.dot(x, s, preferred_element_type=jnp.float32,
                   precision=jax.lax.Precision.HIGHEST) * inv_c
    xc = x - mean
    var = jnp.dot(xc * xc, s, preferred_element_type=jnp.float32,
                  precision=jax.lax.Precision.HIGHEST) * inv_c
    y = xc * jax.lax.rsqrt(var + jnp.float32(eps))
    g = g_ref[...].astype(jnp.float32)                      # (1, 128) tiled gamma
    b = b_ref[...].astype(jnp.float32)
    o_ref[...] = (y * g + b).astype(o_ref.dtype)


def minkowski_layer_norm(feats, gamma, beta, eps=1e-6,
                         target_block_bytes=2 * 1024 * 1024):
    """Channel-wise LayerNorm over sparse-tensor features.

    feats: [N, C] (any float dtype); gamma, beta: [C].
    Returns [N, C] with the same dtype as `feats`.
    """
    N, C = feats.shape
    itemsize = jnp.dtype(feats.dtype).itemsize
    sublane = _sublane(feats.dtype)

    # Scheduler hint: this call is memory-bound.
    cost = pl.CostEstimate(
        flops=8 * N * C,
        transcendentals=N,
        bytes_accessed=2 * N * C * itemsize + 2 * C * 4,
    )
    cparams = pltpu.CompilerParams(
        dimension_semantics=("parallel",),
        vmem_limit_bytes=32 * 1024 * 1024,
    )

    groups = _LANES // C if (0 < C <= _LANES and _LANES % C == 0) else 0
    use_packed = groups > 1 and N > 0 and (N % groups == 0)

    if use_packed:
        # View [N, C] as [N*C/128, 128] (contiguous reshape: layout plumbing only).
        rows = (N * C) // _LANES
        xp = feats.reshape(rows, _LANES)
        g2 = jnp.tile(gamma.reshape(1, C), (1, groups))      # (1, 128)
        b2 = jnp.tile(beta.reshape(1, C), (1, groups))       # (1, 128)
        lane = jnp.arange(_LANES, dtype=jnp.int32)
        seg = (lane[:, None] // C == lane[None, :] // C).astype(jnp.float32)

        tm = _pick_row_tile(rows, _LANES * itemsize, sublane, target_block_bytes)
        out = pl.pallas_call(
            functools.partial(_ln_packed_kernel, c=C, eps=eps),
            out_shape=jax.ShapeDtypeStruct((rows, _LANES), feats.dtype),
            grid=(pl.cdiv(rows, tm),),
            in_specs=[
                pl.BlockSpec((tm, _LANES), lambda i: (i, 0)),       # features
                pl.BlockSpec((1, _LANES), lambda i: (0, 0)),        # gamma (resident)
                pl.BlockSpec((1, _LANES), lambda i: (0, 0)),        # beta  (resident)
                pl.BlockSpec((_LANES, _LANES), lambda i: (0, 0)),   # segment matrix
            ],
            out_specs=pl.BlockSpec((tm, _LANES), lambda i: (i, 0)),
            compiler_params=cparams,
            cost_estimate=cost,
        )(xp, g2, b2, seg)
        return out.reshape(N, C)

    # Generic path (fast when C % 128 == 0; always correct).
    tm = _pick_row_tile(N, C * itemsize, sublane, target_block_bytes)
    return pl.pallas_call(
        functools.partial(_ln_kernel, eps=eps),
        out_shape=jax.ShapeDtypeStruct((N, C), feats.dtype),
        grid=(pl.cdiv(N, tm),),
        in_specs=[
            pl.BlockSpec((tm, C), lambda i: (i, 0)),    # feature tile
            pl.BlockSpec((1, C), lambda i: (0, 0)),     # gamma (resident)
            pl.BlockSpec((1, C), lambda i: (0, 0)),     # beta  (resident)
        ],
        out_specs=pl.BlockSpec((tm, C), lambda i: (i, 0)),
        compiler_params=cparams,
        cost_estimate=cost,
    )(feats, gamma.reshape(1, C), beta.reshape(1, C))


def _reference_layer_norm(feats, gamma, beta, eps=1e-6):
    x = feats.astype(jnp.float32)
    mean = jnp.mean(x, axis=-1, keepdims=True)
    var = jnp.mean((x - mean) ** 2, axis=-1, keepdims=True)
    y = (x - mean) * jax.lax.rsqrt(var + eps)
    return (y * gamma.astype(jnp.float32) + beta.astype(jnp.float32)).astype(feats.dtype)


if __name__ == "__main__":
    key = jax.random.PRNGKey(0)
    k_feat, k_gamma, k_beta, k_feat2, k_gamma2, k_beta2 = jax.random.split(key, 6)

    # Case 1 (lane-dense packed path): N points, C=32 channels (128 % C == 0).
    N, C, eps = 200, 32, 1e-6
    feats = jax.random.normal(k_feat, (N, C), dtype=jnp.float32)
    gamma = 1.0 + 0.1 * jax.random.normal(k_gamma, (C,), dtype=jnp.float32)
    beta = 0.1 * jax.random.normal(k_beta, (C,), dtype=jnp.float32)

    out = jax.block_until_ready(minkowski_layer_norm(feats, gamma, beta, eps=eps))
    ref = _reference_layer_norm(feats, gamma, beta, eps=eps)
    assert out.shape == (N, C) and out.dtype == feats.dtype
    assert jnp.allclose(out, ref, atol=1e-5, rtol=1e-5), "packed path mismatch"

    # Case 2 (generic fallback path, ragged last block): C does not divide 128.
    N2, C2 = 37, 40
    feats2 = jax.random.normal(k_feat2, (N2, C2), dtype=jnp.float32)
    gamma2 = 1.0 + 0.1 * jax.random.normal(k_gamma2, (C2,), dtype=jnp.float32)
    beta2 = 0.1 * jax.random.normal(k_beta2, (C2,), dtype=jnp.float32)

    out2 = jax.block_until_ready(minkowski_layer_norm(feats2, gamma2, beta2, eps=eps))
    ref2 = _reference_layer_norm(feats2, gamma2, beta2, eps=eps)
    assert out2.shape == (N2, C2)
    assert jnp.allclose(out2, ref2, atol=1e-5, rtol=1e-5), "generic path mismatch"

    print("KERNEL_OK")
</pallas_src>

<mosaic_0001>
module attributes {stable_mosaic.version = 11 : i64} {
  func.func @_ln_packed_kernel(%arg0: i32, %arg1: memref<32x128xf32, #tpu.memory_space<vmem>>, %arg2: memref<1x128xf32, #tpu.memory_space<vmem>>, %arg3: memref<1x128xf32, #tpu.memory_space<vmem>>, %arg4: memref<128x128xf32, #tpu.memory_space<vmem>>, %arg5: memref<32x128xf32, #tpu.memory_space<vmem>>) attributes {dimension_semantics = [#tpu.dimension_semantics<parallel>], iteration_bounds = array<i64: 2>, scalar_prefetch = 0 : i64, scratch_operands = 0 : i64, tpu.core_type = #tpu.core_type<tc>, window_params = [{transform_indices = @transform_0, window_bounds = array<i64: 32, 128>}, {pipeline_mode = #tpu.pipeline_mode<synchronous>, transform_indices = @transform_1, window_bounds = array<i64: 1, 128>}, {pipeline_mode = #tpu.pipeline_mode<synchronous>, transform_indices = @transform_2, window_bounds = array<i64: 1, 128>}, {pipeline_mode = #tpu.pipeline_mode<synchronous>, transform_indices = @transform_3, window_bounds = array<i64: 128, 128>}, {transform_indices = @transform_4, window_bounds = array<i64: 32, 128>}]} {
    %c0 = arith.constant 0 : index
    %c0_0 = arith.constant 0 : index
    %0 = vector.load %arg1[%c0, %c0_0] : memref<32x128xf32, #tpu.memory_space<vmem>>, vector<32x128xf32>
    %c0_1 = arith.constant 0 : index
    %c0_2 = arith.constant 0 : index
    %1 = vector.load %arg4[%c0_1, %c0_2] : memref<128x128xf32, #tpu.memory_space<vmem>>, vector<128x128xf32>
    %cst = arith.constant dense<0.000000e+00> : vector<32x128xf32>
    %2 = tpu.matmul %0, %1, %cst {dimension_numbers = #tpu.dot_dimension_numbers<[1], [0], [0], [1], [0, 0, 1, 1], [], []>, precision = #tpu.contract_precision<fp32>} : vector<32x128xf32>, vector<128x128xf32>, vector<32x128xf32> -> vector<32x128xf32>
    %cst_3 = arith.constant 3.125000e-02 : f32
    %3 = vector.broadcast %cst_3 : f32 to vector<32x128xf32>
    %4 = arith.mulf %2, %3 : vector<32x128xf32>
    %5 = arith.subf %0, %4 : vector<32x128xf32>
    %6 = arith.mulf %5, %5 : vector<32x128xf32>
    %cst_4 = arith.constant dense<0.000000e+00> : vector<32x128xf32>
    %7 = tpu.matmul %6, %1, %cst_4 {dimension_numbers = #tpu.dot_dimension_numbers<[1], [0], [0], [1], [0, 0, 1, 1], [], []>, precision = #tpu.contract_precision<fp32>} : vector<32x128xf32>, vector<128x128xf32>, vector<32x128xf32> -> vector<32x128xf32>
    %cst_5 = arith.constant 3.125000e-02 : f32
    %8 = vector.broadcast %cst_5 : f32 to vector<32x128xf32>
    %9 = arith.mulf %7, %8 : vector<32x128xf32>
    %cst_6 = arith.constant 9.99999997E-7 : f32
    %10 = vector.broadcast %cst_6 : f32 to vector<32x128xf32>
    %11 = arith.addf %9, %10 : vector<32x128xf32>
    %12 = math.rsqrt %11 : vector<32x128xf32>
    %13 = arith.mulf %5, %12 : vector<32x128xf32>
    %c0_7 = arith.constant 0 : index
    %c0_8 = arith.constant 0 : index
    %14 = vector.load %arg2[%c0_7, %c0_8] : memref<1x128xf32, #tpu.memory_space<vmem>>, vector<1x128xf32>
    %c0_9 = arith.constant 0 : index
    %c0_10 = arith.constant 0 : index
    %15 = vector.load %arg3[%c0_9, %c0_10] : memref<1x128xf32, #tpu.memory_space<vmem>>, vector<1x128xf32>
    %16 = vector.broadcast %14 : vector<1x128xf32> to vector<32x128xf32>
    %17 = arith.mulf %13, %16 : vector<32x128xf32>
    %18 = vector.broadcast %15 : vector<1x128xf32> to vector<32x128xf32>
    %19 = arith.addf %17, %18 : vector<32x128xf32>
    %c0_11 = arith.constant 0 : index
    %c0_12 = arith.constant 0 : index
    %20 = vector.load %arg5[%c0_11, %c0_12] : memref<32x128xf32, #tpu.memory_space<vmem>>, vector<32x128xf32>
    tpu.vector_store %arg5[%c0_11, %c0_12], %19 {strides = array<i32>} : memref<32x128xf32, #tpu.memory_space<vmem>>, vector<32x128xf32>,
    return
  }
  func.func @transform_0(%arg0: i32) -> (i32, i32) {
    %c0_i32 = arith.constant 0 : i32
    %c0_i32_0 = arith.constant 0 : i32
    return %arg0, %c0_i32 : i32, i32
  }
  func.func @transform_1(%arg0: i32) -> (i32, i32) {
    %c0_i32 = arith.constant 0 : i32
    %c0_i32_0 = arith.constant 0 : i32
    %c0_i32_1 = arith.constant 0 : i32
    return %c0_i32, %c0_i32_0 : i32, i32
  }
  func.func @transform_2(%arg0: i32) -> (i32, i32) {
    %c0_i32 = arith.constant 0 : i32
    %c0_i32_0 = arith.constant 0 : i32
    %c0_i32_1 = arith.constant 0 : i32
    return %c0_i32, %c0_i32_0 : i32, i32
  }
  func.func @transform_3(%arg0: i32) -> (i32, i32) {
    %c0_i32 = arith.constant 0 : i32
    %c0_i32_0 = arith.constant 0 : i32
    %c0_i32_1 = arith.constant 0 : i32
    return %c0_i32, %c0_i32_0 : i32, i32
  }
  func.func @transform_4(%arg0: i32) -> (i32, i32) {
    %c0_i32 = arith.constant 0 : i32
    %c0_i32_0 = arith.constant 0 : i32
    return %arg0, %c0_i32 : i32, i32
  }
}

</mosaic_0001>

<llo_original>
// kernel: tpu_custom_call.1
$region0: #{tpu_custom_call.1}
  #allocation0 [shape = 'u32[]', space=smem, size = 0x4, offset = 0x4, fixed_abs, tag = 'smem constant byte address 0x4 - core index']
  #allocation1 [shape = 'u32[144,128]{1,0:T(1,128)}', space=vmem, size = 0x12000, scoped, tag = 'internal scratch']
  %s0 = inlined_call_operand.hbm [shape: f32[50,128], index: 0, kind: input, shape index: {}]
  %s1 = inlined_call_operand.vmem [shape: f32[1,128], index: 1, kind: input, shape index: {}]
  %s2 = inlined_call_operand.vmem [shape: f32[1,128], index: 2, kind: input, shape index: {}]
  %s3 = inlined_call_operand.hbm [shape: f32[128,128], index: 3, kind: input, shape index: {}]
  %s4 = inlined_call_operand.hbm [shape: f32[50,128], index: 4, kind: output, shape index: {}]
  %s5 = sld [smem:[#allocation0]]
  $region57: #{tpu_custom_call.1} parent=0
    _
  %s7 = ssub.s32 1, %s5
  %s8 = scalar_select 0, %s7, %s5
  $region1: #{tpu_custom_call.1} parent=0
    #allocation2 [shape = 'u8[32768]{0}', space=vmem, size = 0x8000, scoped, tag = 'input window, operand 0']
    #allocation3 [shape = 's32[2]{0}', space=sflag, size = 0x8, scoped, tag = 'scoped memory for tpu_custom_call.1']
    #allocation4 [shape = 's32[2]{0}', space=sflag, size = 0x8, scoped, tag = 'scoped memory for tpu_custom_call.1']
    #allocation5 [shape = 'u8[65536]{0}', space=vmem, size = 0x10000, scoped, tag = 'input window, operand 3, single buffered']
    #allocation6 [shape = 's32[1]{0}', space=sflag, size = 0x4, scoped, tag = 'scoped memory for tpu_custom_call.1']
    #allocation7 [shape = 'u8[32768]{0}', space=vmem, size = 0x8000, scoped, tag = 'output window, operand 0']
    %9 = vsyncpa [#allocation3], 0
    %s10 = scalar_lea.sflag [#allocation3], 1
    %11 = vsyncpa %s10, 0
    %12 = vsyncpa [#allocation6], 0
    %13 = vsyncpa [#allocation4], 0
    %s14 = scalar_lea.sflag [#allocation4], 1
    %15 = vsyncpa %s14, 0
    loop: start=0, step=1, limit=4
    $region2: #{tpu_custom_call.1} parent=1 // loop_pre_header
      _
    $region3: #{tpu_custom_call.1} parent=1 // loop_header
      %s17 = sphi 0, %s21
      %p18 = scmp.ge.s32.totalorder %s17, 4
      %s27 = sphi 0, %s29
      %s30 = sphi 0, %s27
      %s31 = sphi 0, %s30
      %s47 = sphi 0, %s31
      %s51 = sphi 0, %s51
      %s53 = sphi 0, %s51
      %s54 = sphi 0, %s53
      %s68 = sphi 0, %s54
      %s72 = sphi 0, %s72
      %s74 = sphi 0, %s72
      %s75 = sphi 0, %s74
      %s89 = sphi 0, %s75
      %s93 = sphi 0, %s93
      %s95 = sphi 0, %s93
      %s96 = sphi 0, %s95
      %s110 = sphi 0, %s96
      %s116 = sphi 0, %s118
      %s119 = sphi 0, %s116
      %s120 = sphi 0, %s119
      %s136 = sphi 0, %s120
    $region4: #{tpu_custom_call.1} parent=1 // loop_header_branch
      %20 = sbr.rel (%p18) target = $region8
    $region5: #{tpu_custom_call.1} parent=1 // loop_body
      %s22 = ssub.s32 %s17, 1
      %s23 = ssub.s32 %s17, 2
      %s24 = sadd.s32 %s17, 1
      %s25 = ssub.s32 %s17, %s24
      %p26 = scmp.eq.s32.totalorder %s25, 0
      %s28 = sadd.s32 %s27, 1
      %s29 = scalar_select %p26, %s27, %s28
      %p32 = pneg %p26
      %p33 = scmp.eq.s32.totalorder %s17, 1
      %p34 = por %p32, %p33
      %p35 = scmp.ne.s32.totalorder %s27, %s30
      %p36 = scmp.eq.s32.totalorder %s17, 0
      %p37 = por %p35, %p36
      %p38 = scmp.ne.s32.totalorder %s27, %s30
      %p39 = scmp.eq.s32.totalorder %s22, 1
      %p40 = por %p38, %p39
      %p41 = scmp.ne.s32.totalorder %s30, %s31
      %p42 = scmp.eq.s32.totalorder %s22, 0
      %p43 = por %p41, %p42
      %p44 = scmp.ne.s32.totalorder %s30, %s31
      %p45 = scmp.eq.s32.totalorder %s23, 1
      %p46 = por %p44, %p45
      %p48 = scmp.ne.s32.totalorder %s31, %s47
      %p49 = scmp.eq.s32.totalorder %s23, 0
      %p50 = por %p48, %p49
      %s52 = sadd.s32 %s51, 1
      %p55 = scmp.eq.s32.totalorder %s17, 1
      %p56 = scmp.ne.s32.totalorder %s51, %s53
      %p57 = scmp.eq.s32.totalorder %s17, 0
      %p58 = por %p56, %p57
      %p59 = scmp.ne.s32.totalorder %s51, %s53
      %p60 = scmp.eq.s32.totalorder %s22, 1
      %p61 = por %p59, %p60
      %p62 = scmp.ne.s32.totalorder %s53, %s54
      %p63 = scmp.eq.s32.totalorder %s22, 0
      %p64 = por %p62, %p63
      %p65 = scmp.ne.s32.totalorder %s53, %s54
      %p66 = scmp.eq.s32.totalorder %s23, 1
      %p67 = por %p65, %p66
      %p69 = scmp.ne.s32.totalorder %s54, %s68
      %p70 = scmp.eq.s32.totalorder %s23, 0
      %p71 = por %p69, %p70
      %s73 = sadd.s32 %s72, 1
      %p76 = scmp.eq.s32.totalorder %s17, 1
      %p77 = scmp.ne.s32.totalorder %s72, %s74
      %p78 = scmp.eq.s32.totalorder %s17, 0
      %p79 = por %p77, %p78
      %p80 = scmp.ne.s32.totalorder %s72, %s74
      %p81 = scmp.eq.s32.totalorder %s22, 1
      %p82 = por %p80, %p81
      %p83 = scmp.ne.s32.totalorder %s74, %s75
      %p84 = scmp.eq.s32.totalorder %s22, 0
      %p85 = por %p83, %p84
      %p86 = scmp.ne.s32.totalorder %s74, %s75
      %p87 = scmp.eq.s32.totalorder %s23, 1
      %p88 = por %p86, %p87
      %p90 = scmp.ne.s32.totalorder %s75, %s89
      %p91 = scmp.eq.s32.totalorder %s23, 0
      %p92 = por %p90, %p91
      %s94 = sadd.s32 %s93, 1
      %p97 = scmp.eq.s32.totalorder %s17, 1
      %p98 = scmp.ne.s32.totalorder %s93, %s95
      %p99 = scmp.eq.s32.totalorder %s17, 0
      %p100 = por %p98, %p99
      %p101 = scmp.ne.s32.totalorder %s93, %s95
      %p102 = scmp.eq.s32.totalorder %s22, 1
      %p103 = por %p101, %p102
      %p104 = scmp.ne.s32.totalorder %s95, %s96
      %p105 = scmp.eq.s32.totalorder %s22, 0
      %p106 = por %p104, %p105
      %p107 = scmp.ne.s32.totalorder %s95, %s96
      %p108 = scmp.eq.s32.totalorder %s23, 1
      %p109 = por %p107, %p108
      %p111 = scmp.ne.s32.totalorder %s96, %s110
      %p112 = scmp.eq.s32.totalorder %s23, 0
      %p113 = por %p111, %p112
      %s114 = ssub.s32 %s17, %s24
      %p115 = scmp.eq.s32.totalorder %s114, 0
      %s117 = sadd.s32 %s116, 1
      %s118 = scalar_select %p115, %s116, %s117
      %p121 = pneg %p115
      %p122 = scmp.eq.s32.totalorder %s17, 1
      %p123 = por %p121, %p122
      %p124 = scmp.ne.s32.totalorder %s116, %s119
      %p125 = scmp.eq.s32.totalorder %s17, 0
      %p126 = por %p124, %p125
      %p127 = scmp.ne.s32.totalorder %s116, %s119
      %p128 = scmp.eq.s32.totalorder %s22, 1
      %p129 = por %p127, %p128
      %p130 = scmp.ne.s32.totalorder %s119, %s120
      %p131 = scmp.eq.s32.totalorder %s22, 0
      %p132 = por %p130, %p131
      %p133 = scmp.ne.s32.totalorder %s119, %s120
      %p134 = scmp.eq.s32.totalorder %s23, 1
      %p135 = por %p133, %p134
      %p137 = scmp.ne.s32.totalorder %s120, %s136
      %p138 = scmp.eq.s32.totalorder %s23, 0
      %p139 = por %p137, %p138
      %p140 = scmp.le.s32.totalorder 1, %s17
      %p141 = scmp.lt.s32.totalorder %s17, 3
      %p142 = pnand %p140, %p141
      %p143 = pneg %p142
      // Predicated region
      $region9: #{tpu_custom_call.1} parent=5 // pred_check
        _
      $region10: #{tpu_custom_call.1} parent=5 // pred_check_branch
        %145 = sbr.rel (%p142) target = $region12
      $region11: #{tpu_custom_call.1} parent=5 // pred_region
        %s146 = ssub.s32 %s17, 1
        // Predicated region
        $region13: #{tpu_custom_call.1} parent=11 // pred_check
          %p147 = pneg %p64
        $region14: #{tpu_custom_call.1} parent=11 // pred_check_branch
          %149 = sbr.rel (%p147) target = $region16
        $region15: #{tpu_custom_call.1} parent=11 // pred_region
          _
        $region16: #{tpu_custom_call.1} parent=11 // pred_fallthru
          _
        // Predicated region
        $region17: #{tpu_custom_call.1} parent=11 // pred_check
          %p150 = pneg %p85
        $region18: #{tpu_custom_call.1} parent=11 // pred_check_branch
          %152 = sbr.rel (%p150) target = $region20
        $region19: #{tpu_custom_call.1} parent=11 // pred_region
          _
        $region20: #{tpu_custom_call.1} parent=11 // pred_fallthru
          _
        // Predicated region
        $region21: #{tpu_custom_call.1} parent=11 // pred_check
          %p153 = pneg %p106
        $region22: #{tpu_custom_call.1} parent=11 // pred_check_branch
          %155 = sbr.rel (%p153) target = $region24
        $region23: #{tpu_custom_call.1} parent=11 // pred_region
          %s157 = ssub.s32 2048, 2048
          %158 = vsyncadd [#allocation6], %s157
          %s159 = sshll.u32 [#allocation5], 4
          %s160 = int_to_ptr.vmem [resolvable:$true] %s159
          %165 = dma.hbm_to_vmem [thread:$0]  %s3, 2048, %s160, [#allocation6], 128, 128, 8
        $region24: #{tpu_custom_call.1} parent=11 // pred_fallthru
          _
      $region12: #{tpu_custom_call.1} parent=5 // pred_fallthru
        _
      %p166 = scmp.lt.s32.totalorder %s17, 2
      // Predicated region
      $region25: #{tpu_custom_call.1} parent=5 // pred_check
        %p167 = pneg %p166
      $region26: #{tpu_custom_call.1} parent=5 // pred_check_branch
        %169 = sbr.rel (%p167) target = $region28
      $region27: #{tpu_custom_call.1} parent=5 // pred_region
        // Predicated region
        $region29: #{tpu_custom_call.1} parent=27 // pred_check
          %p170 = pneg %p37
        $region30: #{tpu_custom_call.1} parent=27 // pred_check_branch
          %172 = sbr.rel (%p170) target = $region32
        $region31: #{tpu_custom_call.1} parent=27 // pred_region
          %s173 = sand.u32 %s27, 1
          %s174 = scalar_lea.sflag [#allocation3], %s173
          %s175 = sand.u32 %s27, 1
          %s176 = smul.addr %s175, 32
          %s177 = scalar_lea.vmem [#allocation2], %s176
          %s178 = smul.u32 4, %s17
          %s179 = ssub.s32 7, %s178
          %p180 = scmp.lt.s32.totalorder %s179, 4
          %s181 = scalar_select %p180, %s179, 4
          %s182 = smul.u32 128, %s181
          %s184 = ssub.s32 512, %s182
          %185 = vsyncadd %s174, %s184
          %p186 = scmp.ne.s32.totalorder 0, %s182
          %s187 = smul.addr %s178, 128
          %s188 = scalar_lea.hbm %s0, %s187
          %s189 = smul.u32 8, %s181
          %s190 = sshll.u32 %s177, 4
          %s191 = int_to_ptr.vmem [resolvable:$true] %s190
          %s192 = sshll.u32 %s189, 4
          %196 = dma.hbm_to_vmem [thread:$0]  (%p186), %s188, %s192, %s191, %s174, 128, 128, 8
        $region32: #{tpu_custom_call.1} parent=27 // pred_fallthru
          _
      $region28: #{tpu_custom_call.1} parent=5 // pred_fallthru
        _
      %p197 = scmp.le.s32.totalorder 1, %s17
      %p198 = scmp.lt.s32.totalorder %s17, 3
      %p199 = pnand %p197, %p198
      %p200 = pneg %p199
      // Predicated region
      $region33: #{tpu_custom_call.1} parent=5 // pred_check
        _
      $region34: #{tpu_custom_call.1} parent=5 // pred_check_branch
        %202 = sbr.rel (%p199) target = $region36
      $region35: #{tpu_custom_call.1} parent=5 // pred_region
        %s203 = ssub.s32 %s17, 1
        %s204 = sand.u32 %s30, 1
        %s205 = scalar_lea.sflag [#allocation3], %s204
        %s206 = sand.u32 %s30, 1
        %s207 = smul.addr %s206, 32
        %s208 = scalar_lea.vmem [#allocation2], %s207
        // Predicated region
        $region37: #{tpu_custom_call.1} parent=35 // pred_check
          %p209 = pneg %p43
        $region38: #{tpu_custom_call.1} parent=35 // pred_check_branch
          %211 = sbr.rel (%p209) target = $region40
        $region39: #{tpu_custom_call.1} parent=35 // pred_region
          %212 = dma.done %s205, 512
        $region40: #{tpu_custom_call.1} parent=35 // pred_fallthru
          _
        // Predicated region
        $region41: #{tpu_custom_call.1} parent=35 // pred_check
          %p213 = pneg %p106
        $region42: #{tpu_custom_call.1} parent=35 // pred_check_branch
          %215 = sbr.rel (%p213) target = $region44
        $region43: #{tpu_custom_call.1} parent=35 // pred_region
          %216 = dma.done [#allocation6], 2048
        $region44: #{tpu_custom_call.1} parent=35 // pred_fallthru
          _
        %s217 = sand.u32 %s30, 1
        %s218 = scalar_lea.sflag [#allocation3], %s217
        %s219 = sand.u32 %s30, 1
        %s220 = smul.addr %s219, 32
        %s221 = scalar_lea.vmem [#allocation2], %s220
        %p222 = pneg %p43
        %p223 = pneg %p40
        %p224 = pneg %p64
        %p225 = pneg %p61
        %p226 = pneg %p85
        %p227 = pneg %p82
        %p228 = pneg %p106
        %p229 = pneg %p103
        %p230 = pneg %p132
        %p231 = pneg %p129
        %s232 = sand.u32 %s119, 1
        %s233 = scalar_lea.sflag [#allocation4], %s232
        %s234 = sand.u32 %s119, 1
        %s235 = smul.addr %s234, 32
        %s236 = scalar_lea.vmem [#allocation7], %s235
        %s237 = smul.u32 4, %s22
        %s238 = ssub.s32 7, %s237
        %p239 = scmp.lt.s32.totalorder %s238, 4
        %s240 = scalar_select %p239, %s238, 4
        %s241 = smul.u32 128, %s240
        %s242 = smul.u32 4, %s22
        %s243 = ssub.s32 7, %s242
        %p244 = scmp.lt.s32.totalorder %s243, 4
        %s245 = scalar_select %p244, %s243, 4
        %s246 = smul.u32 128, %s245
        %v247 = vld [vmem:[%s208] sm:$0xff]
        %v248 = vld [vmem:[%s208 + $0x8] sm:$0xff]
        %v249 = vld [vmem:[%s208 + $0x10] sm:$0xff]
        %v250 = vld [vmem:[%s208 + $0x18] sm:$0xff]
        %v251 = vld [vmem:[#allocation5] sm:$0xff]
        %v252 = vld [vmem:[#allocation5 + $0x8] sm:$0xff]
        %v253 = vld [vmem:[#allocation5 + $0x10] sm:$0xff]
        %v254 = vld [vmem:[#allocation5 + $0x18] sm:$0xff]
        %v255 = vld [vmem:[#allocation5 + $0x20] sm:$0xff]
        %v256 = vld [vmem:[#allocation5 + $0x28] sm:$0xff]
        %v257 = vld [vmem:[#allocation5 + $0x30] sm:$0xff]
        %v258 = vld [vmem:[#allocation5 + $0x38] sm:$0xff]
        %v259 = vld [vmem:[#allocation5 + $0x40] sm:$0xff]
        %v260 = vld [vmem:[#allocation5 + $0x48] sm:$0xff]
        %v261 = vld [vmem:[#allocation5 + $0x50] sm:$0xff]
        %v262 = vld [vmem:[#allocation5 + $0x58] sm:$0xff]
        %v263 = vld [vmem:[#allocation5 + $0x60] sm:$0xff]
        %v264 = vld [vmem:[#allocation5 + $0x68] sm:$0xff]
        %v265 = vld [vmem:[#allocation5 + $0x70] sm:$0xff]
        %v266 = vld [vmem:[#allocation5 + $0x78] sm:$0xff]
        %267 = vmatprep.subr.mxu0 0.0
        %v268 = vand.u32 %v251, 4294901760
        %269 = vmatpush1.msra.mxu0 %v268
        %270 = vmatprep.subr.mxu0 0.0
        %v271 = vand.u32 %v252, 4294901760
        %272 = vmatpush1.msra.mxu0 %v271
        %273 = vmatprep.subr.mxu0 0.0
        %v274 = vand.u32 %v253, 4294901760
        %275 = vmatpush1.msra.mxu0 %v274
        %276 = vmatprep.subr.mxu0 0.0
        %v277 = vand.u32 %v254, 4294901760
        %278 = vmatpush1.msra.mxu0 %v277
        %279 = vmatprep.subr.mxu0 0.0
        %v280 = vand.u32 %v255, 4294901760
        %281 = vmatpush1.msra.mxu0 %v280
        %282 = vmatprep.subr.mxu0 0.0
        %v283 = vand.u32 %v256, 4294901760
        %284 = vmatpush1.msra.mxu0 %v283
        %285 = vmatprep.subr.mxu0 0.0
        %v286 = vand.u32 %v257, 4294901760
        %287 = vmatpush1.msra.mxu0 %v286
        %288 = vmatprep.subr.mxu0 0.0
        %v289 = vand.u32 %v258, 4294901760
        %290 = vmatpush1.msra.mxu0 %v289
        %291 = vmatprep.subr.mxu0 0.0
        %v292 = vand.u32 %v259, 4294901760
        %293 = vmatpush1.msra.mxu0 %v292
        %294 = vmatprep.subr.mxu0 0.0
        %v295 = vand.u32 %v260, 4294901760
        %296 = vmatpush1.msra.mxu0 %v295
        %297 = vmatprep.subr.mxu0 0.0
        %v298 = vand.u32 %v261, 4294901760
        %299 = vmatpush1.msra.mxu0 %v298
        %300 = vmatprep.subr.mxu0 0.0
        %v301 = vand.u32 %v262, 4294901760
        %302 = vmatpush1.msra.mxu0 %v301
        %303 = vmatprep.subr.mxu0 0.0
        %v304 = vand.u32 %v263, 4294901760
        %305 = vmatpush1.msra.mxu0 %v304
        %306 = vmatprep.subr.mxu0 0.0
        %v307 = vand.u32 %v264, 4294901760
        %308 = vmatpush1.msra.mxu0 %v307
        %309 = vmatprep.subr.mxu0 0.0
        %v310 = vand.u32 %v265, 4294901760
        %311 = vmatpush1.msra.mxu0 %v310
        %312 = vmatprep.subr.mxu0 0.0
        %v313 = vand.u32 %v266, 4294901760
        %314 = vmatpush1.msra.mxu0 %v313
        %315 = vmatprep.subr.mxu0 0.0
        %316 = vmatpush1.msra.mxu0 0.0
        %317 = vmatprep.subr.mxu0 0.0
        %318 = vmatpush1.msra.mxu0 0.0
        %319 = vmatprep.subr.mxu0 0.0
        %320 = vmatpush1.msra.mxu0 0.0
        %321 = vmatprep.subr.mxu0 0.0
        %322 = vmatpush1.msra.mxu0 0.0
        %323 = vmatprep.subr.mxu0 0.0
        %324 = vmatpush1.msra.mxu0 0.0
        %325 = vmatprep.subr.mxu0 0.0
        %326 = vmatpush1.msra.mxu0 0.0
        %327 = vmatprep.subr.mxu0 0.0
        %328 = vmatpush1.msra.mxu0 0.0
        %329 = vmatprep.subr.mxu0 0.0
        %330 = vmatpush1.msra.mxu0 0.0
        %331 = vmatprep.subr.mxu0 0.0
        %332 = vmatpush1.msra.mxu0 0.0
        %333 = vmatprep.subr.mxu0 0.0
        %334 = vmatpush1.msra.mxu0 0.0
        %335 = vmatprep.subr.mxu0 0.0
        %336 = vmatpush1.msra.mxu0 0.0
        %337 = vmatprep.subr.mxu0 0.0
        %338 = vmatpush1.msra.mxu0 0.0
        %339 = vmatprep.subr.mxu0 0.0
        %340 = vmatpush1.msra.mxu0 0.0
        %341 = vmatprep.subr.mxu0 0.0
        %342 = vmatpush1.msra.mxu0 0.0
        %343 = vmatprep.subr.mxu0 0.0
        %344 = vmatpush1.msra.mxu0 0.0
        %345 = vmatprep.subr.mxu0 0.0
        %346 = vmatpush1.msra.mxu0 0.0
        %347 = vmatprep.mubr.f32.mxu0 0.0
        %v348 = vand.u32 %v247, 4294901760
        %v349 = vsub.f32 %v247, %v348
        %v350 = vand.u32 %v349, 4294901760
        %v351 = vsub.f32 %v349, %v350
        %v352 = vand.u32 %v351, 4294901760
        %353 = vmatmul.mubr.f32.gmra.mrb[0].mxu0 %v352
        %v354 = vpop.f32.mrb[0].mxu0
        %v355 = vadd.f32 0.0, %v354
        %v356 = vpop.f32.mrb[0].mxu0
        %357 = vmatprep.mubr.f32.mxu0 0.0
        %v358 = vand.u32 %v248, 4294901760
        %v359 = vsub.f32 %v248, %v358
        %v360 = vand.u32 %v359, 4294901760
        %v361 = vsub.f32 %v359, %v360
        %v362 = vand.u32 %v361, 4294901760
        %363 = vmatmul.mubr.f32.gmra.mrb[0].mxu0 %v362
        %v364 = vpop.f32.mrb[0].mxu0
        %v365 = vadd.f32 0.0, %v364
        %v366 = vpop.f32.mrb[0].mxu0
        %367 = vmatprep.mubr.f32.mxu0 0.0
        %v368 = vand.u32 %v249, 4294901760
        %v369 = vsub.f32 %v249, %v368
        %v370 = vand.u32 %v369, 4294901760
        %v371 = vsub.f32 %v369, %v370
        %v372 = vand.u32 %v371, 4294901760
        %373 = vmatmul.mubr.f32.gmra.mrb[0].mxu0 %v372
        %v374 = vpop.f32.mrb[0].mxu0
        %v375 = vadd.f32 0.0, %v374
        %v376 = vpop.f32.mrb[0].mxu0
        %377 = vmatprep.mubr.f32.mxu0 0.0
        %v378 = vand.u32 %v250, 4294901760
        %v379 = vsub.f32 %v250, %v378
        %v380 = vand.u32 %v379, 4294901760
        %v381 = vsub.f32 %v379, %v380
        %v382 = vand.u32 %v381, 4294901760
        %383 = vmatmul.mubr.f32.gmra.mrb[0].mxu0 %v382
        %v384 = vpop.f32.mrb[0].mxu0
        %v385 = vadd.f32 0.0, %v384
        %v386 = vpop.f32.mrb[0].mxu0
        %387 = vdwg.mxu0
        %388 = vmatprep.subr.mxu0 0.0
        %v389 = vand.u32 %v251, 4294901760
        %v390 = vsub.f32 %v251, %v389
        %v391 = vand.u32 %v390, 4294901760
        %v392 = vsub.f32 %v390, %v391
        %v393 = vand.u32 %v392, 4294901760
        %394 = vmatpush1.msra.mxu0 %v393
        %395 = vmatprep.subr.mxu0 0.0
        %v396 = vand.u32 %v252, 4294901760
        %v397 = vsub.f32 %v252, %v396
        %v398 = vand.u32 %v397, 4294901760
        %v399 = vsub.f32 %v397, %v398
        %v400 = vand.u32 %v399, 4294901760
        %401 = vmatpush1.msra.mxu0 %v400
        %402 = vmatprep.subr.mxu0 0.0
        %v403 = vand.u32 %v253, 4294901760
        %v404 = vsub.f32 %v253, %v403
        %v405 = vand.u32 %v404, 4294901760
        %v406 = vsub.f32 %v404, %v405
        %v407 = vand.u32 %v406, 4294901760
        %408 = vmatpush1.msra.mxu0 %v407
        %409 = vmatprep.subr.mxu0 0.0
        %v410 = vand.u32 %v254, 4294901760
        %v411 = vsub.f32 %v254, %v410
        %v412 = vand.u32 %v411, 4294901760
        %v413 = vsub.f32 %v411, %v412
        %v414 = vand.u32 %v413, 4294901760
        %415 = vmatpush1.msra.mxu0 %v414
        %416 = vmatprep.subr.mxu0 0.0
        %v417 = vand.u32 %v255, 4294901760
        %v418 = vsub.f32 %v255, %v417
        %v419 = vand.u32 %v418, 4294901760
        %v420 = vsub.f32 %v418, %v419
        %v421 = vand.u32 %v420, 4294901760
        %422 = vmatpush1.msra.mxu0 %v421
        %423 = vmatprep.subr.mxu0 0.0
        %v424 = vand.u32 %v256, 4294901760
        %v425 = vsub.f32 %v256, %v424
        %v426 = vand.u32 %v425, 4294901760
        %v427 = vsub.f32 %v425, %v426
        %v428 = vand.u32 %v427, 4294901760
        %429 = vmatpush1.msra.mxu0 %v428
        %430 = vmatprep.subr.mxu0 0.0
        %v431 = vand.u32 %v257, 4294901760
        %v432 = vsub.f32 %v257, %v431
        %v433 = vand.u32 %v432, 4294901760
        %v434 = vsub.f32 %v432, %v433
        %v435 = vand.u32 %v434, 4294901760
        %436 = vmatpush1.msra.mxu0 %v435
        %437 = vmatprep.subr.mxu0 0.0
        %v438 = vand.u32 %v258, 4294901760
        %v439 = vsub.f32 %v258, %v438
        %v440 = vand.u32 %v439, 4294901760
        %v441 = vsub.f32 %v439, %v440
        %v442 = vand.u32 %v441, 4294901760
        %443 = vmatpush1.msra.mxu0 %v442
        %444 = vmatprep.subr.mxu0 0.0
        %v445 = vand.u32 %v259, 4294901760
        %v446 = vsub.f32 %v259, %v445
        %v447 = vand.u32 %v446, 4294901760
        %v448 = vsub.f32 %v446, %v447
        %v449 = vand.u32 %v448, 4294901760
        %450 = vmatpush1.msra.mxu0 %v449
        %451 = vmatprep.subr.mxu0 0.0
        %v452 = vand.u32 %v260, 4294901760
        %v453 = vsub.f32 %v260, %v452
        %v454 = vand.u32 %v453, 4294901760
        %v455 = vsub.f32 %v453, %v454
        %v456 = vand.u32 %v455, 4294901760
        %457 = vmatpush1.msra.mxu0 %v456
        %458 = vmatprep.subr.mxu0 0.0
        %v459 = vand.u32 %v261, 4294901760
        %v460 = vsub.f32 %v261, %v459
        %v461 = vand.u32 %v460, 4294901760
        %v462 = vsub.f32 %v460, %v461
        %v463 = vand.u32 %v462, 4294901760
        %464 = vmatpush1.msra.mxu0 %v463
        %465 = vmatprep.subr.mxu0 0.0
        %v466 = vand.u32 %v262, 4294901760
        %v467 = vsub.f32 %v262, %v466
        %v468 = vand.u32 %v467, 4294901760
        %v469 = vsub.f32 %v467, %v468
        %v470 = vand.u32 %v469, 4294901760
        %471 = vmatpush1.msra.mxu0 %v470
        %472 = vmatprep.subr.mxu0 0.0
        %v473 = vand.u32 %v263, 4294901760
        %v474 = vsub.f32 %v263, %v473
        %v475 = vand.u32 %v474, 4294901760
        %v476 = vsub.f32 %v474, %v475
        %v477 = vand.u32 %v476, 4294901760
        %478 = vmatpush1.msra.mxu0 %v477
        %479 = vmatprep.subr.mxu0 0.0
        %v480 = vand.u32 %v264, 4294901760
        %v481 = vsub.f32 %v264, %v480
        %v482 = vand.u32 %v481, 4294901760
        %v483 = vsub.f32 %v481, %v482
        %v484 = vand.u32 %v483, 4294901760
        %485 = vmatpush1.msra.mxu0 %v484
        %486 = vmatprep.subr.mxu0 0.0
        %v487 = vand.u32 %v265, 4294901760
        %v488 = vsub.f32 %v265, %v487
        %v489 = vand.u32 %v488, 4294901760
        %v490 = vsub.f32 %v488, %v489
        %v491 = vand.u32 %v490, 4294901760
        %492 = vmatpush1.msra.mxu0 %v491
        %493 = vmatprep.subr.mxu0 0.0
        %v494 = vand.u32 %v266, 4294901760
        %v495 = vsub.f32 %v266, %v494
        %v496 = vand.u32 %v495, 4294901760
        %v497 = vsub.f32 %v495, %v496
        %v498 = vand.u32 %v497, 4294901760
        %499 = vmatpush1.msra.mxu0 %v498
        %500 = vmatprep.subr.mxu0 0.0
        %501 = vmatpush1.msra.mxu0 0.0
        %502 = vmatprep.subr.mxu0 0.0
        %503 = vmatpush1.msra.mxu0 0.0
        %504 = vmatprep.subr.mxu0 0.0
        %505 = vmatpush1.msra.mxu0 0.0
        %506 = vmatprep.subr.mxu0 0.0
        %507 = vmatpush1.msra.mxu0 0.0
        %508 = vmatprep.subr.mxu0 0.0
        %509 = vmatpush1.msra.mxu0 0.0
        %510 = vmatprep.subr.mxu0 0.0
        %511 = vmatpush1.msra.mxu0 0.0
        %512 = vmatprep.subr.mxu0 0.0
        %513 = vmatpush1.msra.mxu0 0.0
        %514 = vmatprep.subr.mxu0 0.0
        %515 = vmatpush1.msra.mxu0 0.0
        %516 = vmatprep.subr.mxu0 0.0
        %517 = vmatpush1.msra.mxu0 0.0
        %518 = vmatprep.subr.mxu0 0.0
        %519 = vmatpush1.msra.mxu0 0.0
        %520 = vmatprep.subr.mxu0 0.0
        %521 = vmatpush1.msra.mxu0 0.0
        %522 = vmatprep.subr.mxu0 0.0
        %523 = vmatpush1.msra.mxu0 0.0
        %524 = vmatprep.subr.mxu0 0.0
        %525 = vmatpush1.msra.mxu0 0.0
        %526 = vmatprep.subr.mxu0 0.0
        %527 = vmatpush1.msra.mxu0 0.0
        %528 = vmatprep.subr.mxu0 0.0
        %529 = vmatpush1.msra.mxu0 0.0
        %530 = vmatprep.subr.mxu0 0.0
        %531 = vmatpush1.msra.mxu0 0.0
        %532 = vmatprep.mubr.f32.mxu0 0.0
        %v533 = vand.u32 %v247, 4294901760
        %534 = vmatmul.mubr.f32.gmra.mrb[0].mxu0 %v533
        %v535 = vpop.f32.mrb[0].mxu0
        %v536 = vadd.f32 %v355, %v535
        %v537 = vpop.f32.mrb[0].mxu0
        %538 = vmatprep.mubr.f32.mxu0 0.0
        %v539 = vand.u32 %v248, 4294901760
        %540 = vmatmul.mubr.f32.gmra.mrb[0].mxu0 %v539
        %v541 = vpop.f32.mrb[0].mxu0
        %v542 = vadd.f32 %v365, %v541
        %v543 = vpop.f32.mrb[0].mxu0
        %544 = vmatprep.mubr.f32.mxu0 0.0
        %v545 = vand.u32 %v249, 4294901760
        %546 = vmatmul.mubr.f32.gmra.mrb[0].mxu0 %v545
        %v547 = vpop.f32.mrb[0].mxu0
        %v548 = vadd.f32 %v375, %v547
        %v549 = vpop.f32.mrb[0].mxu0
        %550 = vmatprep.mubr.f32.mxu0 0.0
        %v551 = vand.u32 %v250, 4294901760
        %552 = vmatmul.mubr.f32.gmra.mrb[0].mxu0 %v551
        %v553 = vpop.f32.mrb[0].mxu0
        %v554 = vadd.f32 %v385, %v553
        %v555 = vpop.f32.mrb[0].mxu0
        %556 = vdwg.mxu0
        %557 = vmatprep.subr.mxu0 0.0
        %v558 = vand.u32 %v251, 4294901760
        %v559 = vsub.f32 %v251, %v558
        %560 = vmatpush1.msra.mxu0 %v559
        %561 = vmatprep.subr.mxu0 0.0
        %v562 = vand.u32 %v252, 4294901760
        %v563 = vsub.f32 %v252, %v562
        %564 = vmatpush1.msra.mxu0 %v563
        %565 = vmatprep.subr.mxu0 0.0
        %v566 = vand.u32 %v253, 4294901760
        %v567 = vsub.f32 %v253, %v566
        %568 = vmatpush1.msra.mxu0 %v567
        %569 = vmatprep.subr.mxu0 0.0
        %v570 = vand.u32 %v254, 4294901760
        %v571 = vsub.f32 %v254, %v570
        %572 = vmatpush1.msra.mxu0 %v571
        %573 = vmatprep.subr.mxu0 0.0
        %v574 = vand.u32 %v255, 4294901760
        %v575 = vsub.f32 %v255, %v574
        %576 = vmatpush1.msra.mxu0 %v575
        %577 = vmatprep.subr.mxu0 0.0
        %v578 = vand.u32 %v256, 4294901760
        %v579 = vsub.f32 %v256, %v578
        %580 = vmatpush1.msra.mxu0 %v579
        %581 = vmatprep.subr.mxu0 0.0
        %v582 = vand.u32 %v257, 4294901760
        %v583 = vsub.f32 %v257, %v582
        %584 = vmatpush1.msra.mxu0 %v583
        %585 = vmatprep.subr.mxu0 0.0
        %v586 = vand.u32 %v258, 4294901760
        %v587 = vsub.f32 %v258, %v586
        %588 = vmatpush1.msra.mxu0 %v587
        %589 = vmatprep.subr.mxu0 0.0
        %v590 = vand.u32 %v259, 4294901760
        %v591 = vsub.f32 %v259, %v590
        %592 = vmatpush1.msra.mxu0 %v591
        %593 = vmatprep.subr.mxu0 0.0
        %v594 = vand.u32 %v260, 4294901760
        %v595 = vsub.f32 %v260, %v594
        %596 = vmatpush1.msra.mxu0 %v595
        %597 = vmatprep.subr.mxu0 0.0
        %v598 = vand.u32 %v261, 4294901760
        %v599 = vsub.f32 %v261, %v598
        %600 = vmatpush1.msra.mxu0 %v599
        %601 = vmatprep.subr.mxu0 0.0
        %v602 = vand.u32 %v262, 4294901760
        %v603 = vsub.f32 %v262, %v602
        %604 = vmatpush1.msra.mxu0 %v603
        %605 = vmatprep.subr.mxu0 0.0
        %v606 = vand.u32 %v263, 4294901760
        %v607 = vsub.f32 %v263, %v606
        %608 = vmatpush1.msra.mxu0 %v607
        %609 = vmatprep.subr.mxu0 0.0
        %v610 = vand.u32 %v264, 4294901760
        %v611 = vsub.f32 %v264, %v610
        %612 = vmatpush1.msra.mxu0 %v611
        %613 = vmatprep.subr.mxu0 0.0
        %v614 = vand.u32 %v265, 4294901760
        %v615 = vsub.f32 %v265, %v614
        %616 = vmatpush1.msra.mxu0 %v615
        %617 = vmatprep.subr.mxu0 0.0
        %v618 = vand.u32 %v266, 4294901760
        %v619 = vsub.f32 %v266, %v618
        %620 = vmatpush1.msra.mxu0 %v619
        %621 = vmatprep.subr.mxu0 0.0
        %622 = vmatpush1.msra.mxu0 0.0
        %623 = vmatprep.subr.mxu0 0.0
        %624 = vmatpush1.msra.mxu0 0.0
        %625 = vmatprep.subr.mxu0 0.0
        %626 = vmatpush1.msra.mxu0 0.0
        %627 = vmatprep.subr.mxu0 0.0
        %628 = vmatpush1.msra.mxu0 0.0
        %629 = vmatprep.subr.mxu0 0.0
        %630 = vmatpush1.msra.mxu0 0.0
        %631 = vmatprep.subr.mxu0 0.0
        %632 = vmatpush1.msra.mxu0 0.0
        %633 = vmatprep.subr.mxu0 0.0
        %634 = vmatpush1.msra.mxu0 0.0
        %635 = vmatprep.subr.mxu0 0.0
        %636 = vmatpush1.msra.mxu0 0.0
        %637 = vmatprep.subr.mxu0 0.0
        %638 = vmatpush1.msra.mxu0 0.0
        %639 = vmatprep.subr.mxu0 0.0
        %640 = vmatpush1.msra.mxu0 0.0
        %641 = vmatprep.subr.mxu0 0.0
        %642 = vmatpush1.msra.mxu0 0.0
        %643 = vmatprep.subr.mxu0 0.0
        %644 = vmatpush1.msra.mxu0 0.0
        %645 = vmatprep.subr.mxu0 0.0
        %646 = vmatpush1.msra.mxu0 0.0
        %647 = vmatprep.subr.mxu0 0.0
        %648 = vmatpush1.msra.mxu0 0.0
        %649 = vmatprep.subr.mxu0 0.0
        %650 = vmatpush1.msra.mxu0 0.0
        %651 = vmatprep.subr.mxu0 0.0
        %652 = vmatpush1.msra.mxu0 0.0
        %653 = vmatprep.mubr.f32.mxu0 0.0
        %v654 = vand.u32 %v247, 4294901760
        %v655 = vsub.f32 %v247, %v654
        %656 = vmatmul.mubr.f32.gmra.mrb[0].mxu0 %v655
        %v657 = vpop.f32.mrb[0].mxu0
        %v658 = vadd.f32 %v536, %v657
        %v659 = vpop.f32.mrb[0].mxu0
        %660 = vmatprep.mubr.f32.mxu0 0.0
        %v661 = vand.u32 %v248, 4294901760
        %v662 = vsub.f32 %v248, %v661
        %663 = vmatmul.mubr.f32.gmra.mrb[0].mxu0 %v662
        %v664 = vpop.f32.mrb[0].mxu0
        %v665 = vadd.f32 %v542, %v664
        %v666 = vpop.f32.mrb[0].mxu0
        %667 = vmatprep.mubr.f32.mxu0 0.0
        %v668 = vand.u32 %v249, 4294901760
        %v669 = vsub.f32 %v249, %v668
        %670 = vmatmul.mubr.f32.gmra.mrb[0].mxu0 %v669
        %v671 = vpop.f32.mrb[0].mxu0
        %v672 = vadd.f32 %v548, %v671
        %v673 = vpop.f32.mrb[0].mxu0
        %674 = vmatprep.mubr.f32.mxu0 0.0
        %v675 = vand.u32 %v250, 4294901760
        %v676 = vsub.f32 %v250, %v675
        %677 = vmatmul.mubr.f32.gmra.mrb[0].mxu0 %v676
        %v678 = vpop.f32.mrb[0].mxu0
        %v679 = vadd.f32 %v554, %v678
        %v680 = vpop.f32.mrb[0].mxu0
        %681 = vdwg.mxu0
        %682 = vmatprep.subr.mxu0 0.0
        %v683 = vand.u32 %v251, 4294901760
        %684 = vmatpush1.msra.mxu0 %v683
        %685 = vmatprep.subr.mxu0 0.0
        %v686 = vand.u32 %v252, 4294901760
        %687 = vmatpush1.msra.mxu0 %v686
        %688 = vmatprep.subr.mxu0 0.0
        %v689 = vand.u32 %v253, 4294901760
        %690 = vmatpush1.msra.mxu0 %v689
        %691 = vmatprep.subr.mxu0 0.0
        %v692 = vand.u32 %v254, 4294901760
        %693 = vmatpush1.msra.mxu0 %v692
        %694 = vmatprep.subr.mxu0 0.0
        %v695 = vand.u32 %v255, 4294901760
        %696 = vmatpush1.msra.mxu0 %v695
        %697 = vmatprep.subr.mxu0 0.0
        %v698 = vand.u32 %v256, 4294901760
        %699 = vmatpush1.msra.mxu0 %v698
        %700 = vmatprep.subr.mxu0 0.0
        %v701 = vand.u32 %v257, 4294901760
        %702 = vmatpush1.msra.mxu0 %v701
        %703 = vmatprep.subr.mxu0 0.0
        %v704 = vand.u32 %v258, 4294901760
        %705 = vmatpush1.msra.mxu0 %v704
        %706 = vmatprep.subr.mxu0 0.0
        %v707 = vand.u32 %v259, 4294901760
        %708 = vmatpush1.msra.mxu0 %v707
        %709 = vmatprep.subr.mxu0 0.0
        %v710 = vand.u32 %v260, 4294901760
        %711 = vmatpush1.msra.mxu0 %v710
        %712 = vmatprep.subr.mxu0 0.0
        %v713 = vand.u32 %v261, 4294901760
        %714 = vmatpush1.msra.mxu0 %v713
        %715 = vmatprep.subr.mxu0 0.0
        %v716 = vand.u32 %v262, 4294901760
        %717 = vmatpush1.msra.mxu0 %v716
        %718 = vmatprep.subr.mxu0 0.0
        %v719 = vand.u32 %v263, 4294901760
        %720 = vmatpush1.msra.mxu0 %v719
        %721 = vmatprep.subr.mxu0 0.0
        %v722 = vand.u32 %v264, 4294901760
        %723 = vmatpush1.msra.mxu0 %v722
        %724 = vmatprep.subr.mxu0 0.0
        %v725 = vand.u32 %v265, 4294901760
        %726 = vmatpush1.msra.mxu0 %v725
        %727 = vmatprep.subr.mxu0 0.0
        %v728 = vand.u32 %v266, 4294901760
        %729 = vmatpush1.msra.mxu0 %v728
        %730 = vmatprep.subr.mxu0 0.0
        %731 = vmatpush1.msra.mxu0 0.0
        %732 = vmatprep.subr.mxu0 0.0
        %733 = vmatpush1.msra.mxu0 0.0
        %734 = vmatprep.subr.mxu0 0.0
        %735 = vmatpush1.msra.mxu0 0.0
        %736 = vmatprep.subr.mxu0 0.0
        %737 = vmatpush1.msra.mxu0 0.0
        %738 = vmatprep.subr.mxu0 0.0
        %739 = vmatpush1.msra.mxu0 0.0
        %740 = vmatprep.subr.mxu0 0.0
        %741 = vmatpush1.msra.mxu0 0.0
        %742 = vmatprep.subr.mxu0 0.0
        %743 = vmatpush1.msra.mxu0 0.0
        %744 = vmatprep.subr.mxu0 0.0
        %745 = vmatpush1.msra.mxu0 0.0
        %746 = vmatprep.subr.mxu0 0.0
        %747 = vmatpush1.msra.mxu0 0.0
        %748 = vmatprep.subr.mxu0 0.0
        %749 = vmatpush1.msra.mxu0 0.0
        %750 = vmatprep.subr.mxu0 0.0
        %751 = vmatpush1.msra.mxu0 0.0
        %752 = vmatprep.subr.mxu0 0.0
        %753 = vmatpush1.msra.mxu0 0.0
        %754 = vmatprep.subr.mxu0 0.0
        %755 = vmatpush1.msra.mxu0 0.0
        %756 = vmatprep.subr.mxu0 0.0
        %757 = vmatpush1.msra.mxu0 0.0
        %758 = vmatprep.subr.mxu0 0.0
        %759 = vmatpush1.msra.mxu0 0.0
        %760 = vmatprep.subr.mxu0 0.0
        %761 = vmatpush1.msra.mxu0 0.0
        %762 = vmatprep.mubr.f32.mxu0 0.0
        %v763 = vand.u32 %v247, 4294901760
        %v764 = vsub.f32 %v247, %v763
        %v765 = vand.u32 %v764, 4294901760
        %766 = vmatmul.mubr.f32.gmra.mrb[0].mxu0 %v765
        %v767 = vpop.f32.mrb[0].mxu0
        %v768 = vadd.f32 %v658, %v767
        %v769 = vpop.f32.mrb[0].mxu0
        %770 = vmatprep.mubr.f32.mxu0 0.0
        %v771 = vand.u32 %v248, 4294901760
        %v772 = vsub.f32 %v248, %v771
        %v773 = vand.u32 %v772, 4294901760
        %774 = vmatmul.mubr.f32.gmra.mrb[0].mxu0 %v773
        %v775 = vpop.f32.mrb[0].mxu0
        %v776 = vadd.f32 %v665, %v775
        %v777 = vpop.f32.mrb[0].mxu0
        %778 = vmatprep.mubr.f32.mxu0 0.0
        %v779 = vand.u32 %v249, 4294901760
        %v780 = vsub.f32 %v249, %v779
        %v781 = vand.u32 %v780, 4294901760
        %782 = vmatmul.mubr.f32.gmra.mrb[0].mxu0 %v781
        %v783 = vpop.f32.mrb[0].mxu0
        %v784 = vadd.f32 %v672, %v783
        %v785 = vpop.f32.mrb[0].mxu0
        %786 = vmatprep.mubr.f32.mxu0 0.0
        %v787 = vand.u32 %v250, 4294901760
        %v788 = vsub.f32 %v250, %v787
        %v789 = vand.u32 %v788, 4294901760
        %790 = vmatmul.mubr.f32.gmra.mrb[0].mxu0 %v789
        %v791 = vpop.f32.mrb[0].mxu0
        %v792 = vadd.f32 %v679, %v791
        %v793 = vpop.f32.mrb[0].mxu0
        %794 = vdwg.mxu0
        %795 = vmatprep.subr.mxu0 0.0
        %v796 = vand.u32 %v251, 4294901760
        %v797 = vsub.f32 %v251, %v796
        %v798 = vand.u32 %v797, 4294901760
        %799 = vmatpush1.msra.mxu0 %v798
        %800 = vmatprep.subr.mxu0 0.0
        %v801 = vand.u32 %v252, 4294901760
        %v802 = vsub.f32 %v252, %v801
        %v803 = vand.u32 %v802, 4294901760
        %804 = vmatpush1.msra.mxu0 %v803
        %805 = vmatprep.subr.mxu0 0.0
        %v806 = vand.u32 %v253, 4294901760
        %v807 = vsub.f32 %v253, %v806
        %v808 = vand.u32 %v807, 4294901760
        %809 = vmatpush1.msra.mxu0 %v808
        %810 = vmatprep.subr.mxu0 0.0
        %v811 = vand.u32 %v254, 4294901760
        %v812 = vsub.f32 %v254, %v811
        %v813 = vand.u32 %v812, 4294901760
        %814 = vmatpush1.msra.mxu0 %v813
        %815 = vmatprep.subr.mxu0 0.0
        %v816 = vand.u32 %v255, 4294901760
        %v817 = vsub.f32 %v255, %v816
        %v818 = vand.u32 %v817, 4294901760
        %819 = vmatpush1.msra.mxu0 %v818
        %820 = vmatprep.subr.mxu0 0.0
        %v821 = vand.u32 %v256, 4294901760
        %v822 = vsub.f32 %v256, %v821
        %v823 = vand.u32 %v822, 4294901760
        %824 = vmatpush1.msra.mxu0 %v823
        %825 = vmatprep.subr.mxu0 0.0
        %v826 = vand.u32 %v257, 4294901760
        %v827 = vsub.f32 %v257, %v826
        %v828 = vand.u32 %v827, 4294901760
        %829 = vmatpush1.msra.mxu0 %v828
        %830 = vmatprep.subr.mxu0 0.0
        %v831 = vand.u32 %v258, 4294901760
        %v832 = vsub.f32 %v258, %v831
        %v833 = vand.u32 %v832, 4294901760
        %834 = vmatpush1.msra.mxu0 %v833
        %835 = vmatprep.subr.mxu0 0.0
        %v836 = vand.u32 %v259, 4294901760
        %v837 = vsub.f32 %v259, %v836
        %v838 = vand.u32 %v837, 4294901760
        %839 = vmatpush1.msra.mxu0 %v838
        %840 = vmatprep.subr.mxu0 0.0
        %v841 = vand.u32 %v260, 4294901760
        %v842 = vsub.f32 %v260, %v841
        %v843 = vand.u32 %v842, 4294901760
        %844 = vmatpush1.msra.mxu0 %v843
        %845 = vmatprep.subr.mxu0 0.0
        %v846 = vand.u32 %v261, 4294901760
        %v847 = vsub.f32 %v261, %v846
        %v848 = vand.u32 %v847, 4294901760
        %849 = vmatpush1.msra.mxu0 %v848
        %850 = vmatprep.subr.mxu0 0.0
        %v851 = vand.u32 %v262, 4294901760
        %v852 = vsub.f32 %v262, %v851
        %v853 = vand.u32 %v852, 4294901760
        %854 = vmatpush1.msra.mxu0 %v853
        %855 = vmatprep.subr.mxu0 0.0
        %v856 = vand.u32 %v263, 4294901760
        %v857 = vsub.f32 %v263, %v856
        %v858 = vand.u32 %v857, 4294901760
        %859 = vmatpush1.msra.mxu0 %v858
        %860 = vmatprep.subr.mxu0 0.0
        %v861 = vand.u32 %v264, 4294901760
        %v862 = vsub.f32 %v264, %v861
        %v863 = vand.u32 %v862, 4294901760
        %864 = vmatpush1.msra.mxu0 %v863
        %865 = vmatprep.subr.mxu0 0.0
        %v866 = vand.u32 %v265, 4294901760
        %v867 = vsub.f32 %v265, %v866
        %v868 = vand.u32 %v867, 4294901760
        %869 = vmatpush1.msra.mxu0 %v868
        %870 = vmatprep.subr.mxu0 0.0
        %v871 = vand.u32 %v266, 4294901760
        %v872 = vsub.f32 %v266, %v871
        %v873 = vand.u32 %v872, 4294901760
        %874 = vmatpush1.msra.mxu0 %v873
        %875 = vmatprep.subr.mxu0 0.0
        %876 = vmatpush1.msra.mxu0 0.0
        %877 = vmatprep.subr.mxu0 0.0
        %878 = vmatpush1.msra.mxu0 0.0
        %879 = vmatprep.subr.mxu0 0.0
        %880 = vmatpush1.msra.mxu0 0.0
        %881 = vmatprep.subr.mxu0 0.0
        %882 = vmatpush1.msra.mxu0 0.0
        %883 = vmatprep.subr.mxu0 0.0
        %884 = vmatpush1.msra.mxu0 0.0
        %885 = vmatprep.subr.mxu0 0.0
        %886 = vmatpush1.msra.mxu0 0.0
        %887 = vmatprep.subr.mxu0 0.0
        %888 = vmatpush1.msra.mxu0 0.0
        %889 = vmatprep.subr.mxu0 0.0
        %890 = vmatpush1.msra.mxu0 0.0
        %891 = vmatprep.subr.mxu0 0.0
        %892 = vmatpush1.msra.mxu0 0.0
        %893 = vmatprep.subr.mxu0 0.0
        %894 = vmatpush1.msra.mxu0 0.0
        %895 = vmatprep.subr.mxu0 0.0
        %896 = vmatpush1.msra.mxu0 0.0
        %897 = vmatprep.subr.mxu0 0.0
        %898 = vmatpush1.msra.mxu0 0.0
        %899 = vmatprep.subr.mxu0 0.0
        %900 = vmatpush1.msra.mxu0 0.0
        %901 = vmatprep.subr.mxu0 0.0
        %902 = vmatpush1.msra.mxu0 0.0
        %903 = vmatprep.subr.mxu0 0.0
        %904 = vmatpush1.msra.mxu0 0.0
        %905 = vmatprep.subr.mxu0 0.0
        %906 = vmatpush1.msra.mxu0 0.0
        %907 = vmatprep.mubr.f32.mxu0 0.0
        %v908 = vand.u32 %v247, 4294901760
        %909 = vmatmul.mubr.f32.gmra.mrb[0].mxu0 %v908
        %v910 = vpop.f32.mrb[0].mxu0
        %v911 = vadd.f32 %v768, %v910
        %v912 = vpop.f32.mrb[0].mxu0
        %913 = vmatprep.mubr.f32.mxu0 0.0
        %v914 = vand.u32 %v248, 4294901760
        %915 = vmatmul.mubr.f32.gmra.mrb[0].mxu0 %v914
        %v916 = vpop.f32.mrb[0].mxu0
        %v917 = vadd.f32 %v776, %v916
        %v918 = vpop.f32.mrb[0].mxu0
        %919 = vmatprep.mubr.f32.mxu0 0.0
        %v920 = vand.u32 %v249, 4294901760
        %921 = vmatmul.mubr.f32.gmra.mrb[0].mxu0 %v920
        %v922 = vpop.f32.mrb[0].mxu0
        %v923 = vadd.f32 %v784, %v922
        %v924 = vpop.f32.mrb[0].mxu0
        %925 = vmatprep.mubr.f32.mxu0 0.0
        %v926 = vand.u32 %v250, 4294901760
        %927 = vmatmul.mubr.f32.gmra.mrb[0].mxu0 %v926
        %v928 = vpop.f32.mrb[0].mxu0
        %v929 = vadd.f32 %v792, %v928
        %v930 = vpop.f32.mrb[0].mxu0
        %931 = vdwg.mxu0
        %932 = vmatprep.subr.mxu0 0.0
        %v933 = vand.u32 %v251, 4294901760
        %934 = vmatpush1.msra.mxu0 %v933
        %935 = vmatprep.subr.mxu0 0.0
        %v936 = vand.u32 %v252, 4294901760
        %937 = vmatpush1.msra.mxu0 %v936
        %938 = vmatprep.subr.mxu0 0.0
        %v939 = vand.u32 %v253, 4294901760
        %940 = vmatpush1.msra.mxu0 %v939
        %941 = vmatprep.subr.mxu0 0.0
        %v942 = vand.u32 %v254, 4294901760
        %943 = vmatpush1.msra.mxu0 %v942
        %944 = vmatprep.subr.mxu0 0.0
        %v945 = vand.u32 %v255, 4294901760
        %946 = vmatpush1.msra.mxu0 %v945
        %947 = vmatprep.subr.mxu0 0.0
        %v948 = vand.u32 %v256, 4294901760
        %949 = vmatpush1.msra.mxu0 %v948
        %950 = vmatprep.subr.mxu0 0.0
        %v951 = vand.u32 %v257, 4294901760
        %952 = vmatpush1.msra.mxu0 %v951
        %953 = vmatprep.subr.mxu0 0.0
        %v954 = vand.u32 %v258, 4294901760
        %955 = vmatpush1.msra.mxu0 %v954
        %956 = vmatprep.subr.mxu0 0.0
        %v957 = vand.u32 %v259, 4294901760
        %958 = vmatpush1.msra.mxu0 %v957
        %959 = vmatprep.subr.mxu0 0.0
        %v960 = vand.u32 %v260, 4294901760
        %961 = vmatpush1.msra.mxu0 %v960
        %962 = vmatprep.subr.mxu0 0.0
        %v963 = vand.u32 %v261, 4294901760
        %964 = vmatpush1.msra.mxu0 %v963
        %965 = vmatprep.subr.mxu0 0.0
        %v966 = vand.u32 %v262, 4294901760
        %967 = vmatpush1.msra.mxu0 %v966
        %968 = vmatprep.subr.mxu0 0.0
        %v969 = vand.u32 %v263, 4294901760
        %970 = vmatpush1.msra.mxu0 %v969
        %971 = vmatprep.subr.mxu0 0.0
        %v972 = vand.u32 %v264, 4294901760
        %973 = vmatpush1.msra.mxu0 %v972
        %974 = vmatprep.subr.mxu0 0.0
        %v975 = vand.u32 %v265, 4294901760
        %976 = vmatpush1.msra.mxu0 %v975
        %977 = vmatprep.subr.mxu0 0.0
        %v978 = vand.u32 %v266, 4294901760
        %979 = vmatpush1.msra.mxu0 %v978
        %980 = vmatprep.subr.mxu0 0.0
        %981 = vmatpush1.msra.mxu0 0.0
        %982 = vmatprep.subr.mxu0 0.0
        %983 = vmatpush1.msra.mxu0 0.0
        %984 = vmatprep.subr.mxu0 0.0
        %985 = vmatpush1.msra.mxu0 0.0
        %986 = vmatprep.subr.mxu0 0.0
        %987 = vmatpush1.msra.mxu0 0.0
        %988 = vmatprep.subr.mxu0 0.0
        %989 = vmatpush1.msra.mxu0 0.0
        %990 = vmatprep.subr.mxu0 0.0
        %991 = vmatpush1.msra.mxu0 0.0
        %992 = vmatprep.subr.mxu0 0.0
        %993 = vmatpush1.msra.mxu0 0.0
        %994 = vmatprep.subr.mxu0 0.0
        %995 = vmatpush1.msra.mxu0 0.0
        %996 = vmatprep.subr.mxu0 0.0
        %997 = vmatpush1.msra.mxu0 0.0
        %998 = vmatprep.subr.mxu0 0.0
        %999 = vmatpush1.msra.mxu0 0.0
        %1000 = vmatprep.subr.mxu0 0.0
        %1001 = vmatpush1.msra.mxu0 0.0
        %1002 = vmatprep.subr.mxu0 0.0
        %1003 = vmatpush1.msra.mxu0 0.0
        %1004 = vmatprep.subr.mxu0 0.0
        %1005 = vmatpush1.msra.mxu0 0.0
        %1006 = vmatprep.subr.mxu0 0.0
        %1007 = vmatpush1.msra.mxu0 0.0
        %1008 = vmatprep.subr.mxu0 0.0
        %1009 = vmatpush1.msra.mxu0 0.0
        %1010 = vmatprep.subr.mxu0 0.0
        %1011 = vmatpush1.msra.mxu0 0.0
        %1012 = vmatprep.mubr.f32.mxu0 0.0
        %v1013 = vand.u32 %v247, 4294901760
        %1014 = vmatmul.mubr.f32.gmra.mrb[0].mxu0 %v1013
        %v1015 = vpop.f32.mrb[0].mxu0
        %v1016 = vadd.f32 %v911, %v1015
        %v1017 = vpop.f32.mrb[0].mxu0
        %1018 = vmatprep.mubr.f32.mxu0 0.0
        %v1019 = vand.u32 %v248, 4294901760
        %1020 = vmatmul.mubr.f32.gmra.mrb[0].mxu0 %v1019
        %v1021 = vpop.f32.mrb[0].mxu0
        %v1022 = vadd.f32 %v917, %v1021
        %v1023 = vpop.f32.mrb[0].mxu0
        %1024 = vmatprep.mubr.f32.mxu0 0.0
        %v1025 = vand.u32 %v249, 4294901760
        %1026 = vmatmul.mubr.f32.gmra.mrb[0].mxu0 %v1025
        %v1027 = vpop.f32.mrb[0].mxu0
        %v1028 = vadd.f32 %v923, %v1027
        %v1029 = vpop.f32.mrb[0].mxu0
        %1030 = vmatprep.mubr.f32.mxu0 0.0
        %v1031 = vand.u32 %v250, 4294901760
        %1032 = vmatmul.mubr.f32.gmra.mrb[0].mxu0 %v1031
        %v1033 = vpop.f32.mrb[0].mxu0
        %v1034 = vadd.f32 %v929, %v1033
        %v1035 = vpop.f32.mrb[0].mxu0
        %1036 = vdwg.mxu0
        %v1037 = vmul.f32 %v1016, 0.03125
        %v1038 = vmul.f32 %v1022, 0.03125
        %v1039 = vmul.f32 %v1028, 0.03125
        %v1040 = vmul.f32 %v1034, 0.03125
        %v1041 = vsub.f32 %v247, %v1037
        %v1042 = vsub.f32 %v248, %v1038
        %v1043 = vsub.f32 %v249, %v1039
        %v1044 = vsub.f32 %v250, %v1040
        %v1045 = vmul.f32 %v1041, %v1041
        %v1046 = vmul.f32 %v1042, %v1042
        %v1047 = vmul.f32 %v1043, %v1043
        %v1048 = vmul.f32 %v1044, %v1044
        %1049 = vmatprep.subr.mxu0 0.0
        %v1050 = vand.u32 %v251, 4294901760
        %1051 = vmatpush1.msra.mxu0 %v1050
        %1052 = vmatprep.subr.mxu0 0.0
        %v1053 = vand.u32 %v252, 4294901760
        %1054 = vmatpush1.msra.mxu0 %v1053
        %1055 = vmatprep.subr.mxu0 0.0
        %v1056 = vand.u32 %v253, 4294901760
        %1057 = vmatpush1.msra.mxu0 %v1056
        %1058 = vmatprep.subr.mxu0 0.0
        %v1059 = vand.u32 %v254, 4294901760
        %1060 = vmatpush1.msra.mxu0 %v1059
        %1061 = vmatprep.subr.mxu0 0.0
        %v1062 = vand.u32 %v255, 4294901760
        %1063 = vmatpush1.msra.mxu0 %v1062
        %1064 = vmatprep.subr.mxu0 0.0
        %v1065 = vand.u32 %v256, 4294901760
        %1066 = vmatpush1.msra.mxu0 %v1065
        %1067 = vmatprep.subr.mxu0 0.0
        %v1068 = vand.u32 %v257, 4294901760
        %1069 = vmatpush1.msra.mxu0 %v1068
        %1070 = vmatprep.subr.mxu0 0.0
        %v1071 = vand.u32 %v258, 4294901760
        %1072 = vmatpush1.msra.mxu0 %v1071
        %1073 = vmatprep.subr.mxu0 0.0
        %v1074 = vand.u32 %v259, 4294901760
        %1075 = vmatpush1.msra.mxu0 %v1074
        %1076 = vmatprep.subr.mxu0 0.0
        %v1077 = vand.u32 %v260, 4294901760
        %1078 = vmatpush1.msra.mxu0 %v1077
        %1079 = vmatprep.subr.mxu0 0.0
        %v1080 = vand.u32 %v261, 4294901760
        %1081 = vmatpush1.msra.mxu0 %v1080
        %1082 = vmatprep.subr.mxu0 0.0
        %v1083 = vand.u32 %v262, 4294901760
        %1084 = vmatpush1.msra.mxu0 %v1083
        %1085 = vmatprep.subr.mxu0 0.0
        %v1086 = vand.u32 %v263, 4294901760
        %1087 = vmatpush1.msra.mxu0 %v1086
        %1088 = vmatprep.subr.mxu0 0.0
        %v1089 = vand.u32 %v264, 4294901760
        %1090 = vmatpush1.msra.mxu0 %v1089
        %1091 = vmatprep.subr.mxu0 0.0
        %v1092 = vand.u32 %v265, 4294901760
        %1093 = vmatpush1.msra.mxu0 %v1092
        %1094 = vmatprep.subr.mxu0 0.0
        %v1095 = vand.u32 %v266, 4294901760
        %1096 = vmatpush1.msra.mxu0 %v1095
        %1097 = vmatprep.subr.mxu0 0.0
        %1098 = vmatpush1.msra.mxu0 0.0
        %1099 = vmatprep.subr.mxu0 0.0
        %1100 = vmatpush1.msra.mxu0 0.0
        %1101 = vmatprep.subr.mxu0 0.0
        %1102 = vmatpush1.msra.mxu0 0.0
        %1103 = vmatprep.subr.mxu0 0.0
        %1104 = vmatpush1.msra.mxu0 0.0
        %1105 = vmatprep.subr.mxu0 0.0
        %1106 = vmatpush1.msra.mxu0 0.0
        %1107 = vmatprep.subr.mxu0 0.0
        %1108 = vmatpush1.msra.mxu0 0.0
        %1109 = vmatprep.subr.mxu0 0.0
        %1110 = vmatpush1.msra.mxu0 0.0
        %1111 = vmatprep.subr.mxu0 0.0
        %1112 = vmatpush1.msra.mxu0 0.0
        %1113 = vmatprep.subr.mxu0 0.0
        %1114 = vmatpush1.msra.mxu0 0.0
        %1115 = vmatprep.subr.mxu0 0.0
        %1116 = vmatpush1.msra.mxu0 0.0
        %1117 = vmatprep.subr.mxu0 0.0
        %1118 = vmatpush1.msra.mxu0 0.0
        %1119 = vmatprep.subr.mxu0 0.0
        %1120 = vmatpush1.msra.mxu0 0.0
        %1121 = vmatprep.subr.mxu0 0.0
        %1122 = vmatpush1.msra.mxu0 0.0
        %1123 = vmatprep.subr.mxu0 0.0
        %1124 = vmatpush1.msra.mxu0 0.0
        %1125 = vmatprep.subr.mxu0 0.0
        %1126 = vmatpush1.msra.mxu0 0.0
        %1127 = vmatprep.subr.mxu0 0.0
        %1128 = vmatpush1.msra.mxu0 0.0
        %1129 = vmatprep.mubr.f32.mxu0 0.0
        %v1130 = vand.u32 %v1045, 4294901760
        %v1131 = vsub.f32 %v1045, %v1130
        %v1132 = vand.u32 %v1131, 4294901760
        %v1133 = vsub.f32 %v1131, %v1132
        %v1134 = vand.u32 %v1133, 4294901760
        %1135 = vmatmul.mubr.f32.gmra.mrb[0].mxu0 %v1134
        %v1136 = vpop.f32.mrb[0].mxu0
        %v1137 = vadd.f32 0.0, %v1136
        %v1138 = vpop.f32.mrb[0].mxu0
        %1139 = vmatprep.mubr.f32.mxu0 0.0
        %v1140 = vand.u32 %v1046, 4294901760
        %v1141 = vsub.f32 %v1046, %v1140
        %v1142 = vand.u32 %v1141, 4294901760
        %v1143 = vsub.f32 %v1141, %v1142
        %v1144 = vand.u32 %v1143, 4294901760
        %1145 = vmatmul.mubr.f32.gmra.mrb[0].mxu0 %v1144
        %v1146 = vpop.f32.mrb[0].mxu0
        %v1147 = vadd.f32 0.0, %v1146
        %v1148 = vpop.f32.mrb[0].mxu0
        %1149 = vmatprep.mubr.f32.mxu0 0.0
        %v1150 = vand.u32 %v1047, 4294901760
        %v1151 = vsub.f32 %v1047, %v1150
        %v1152 = vand.u32 %v1151, 4294901760
        %v1153 = vsub.f32 %v1151, %v1152
        %v1154 = vand.u32 %v1153, 4294901760
        %1155 = vmatmul.mubr.f32.gmra.mrb[0].mxu0 %v1154
        %v1156 = vpop.f32.mrb[0].mxu0
        %v1157 = vadd.f32 0.0, %v1156
        %v1158 = vpop.f32.mrb[0].mxu0
        %1159 = vmatprep.mubr.f32.mxu0 0.0
        %v1160 = vand.u32 %v1048, 4294901760
        %v1161 = vsub.f32 %v1048, %v1160
        %v1162 = vand.u32 %v1161, 4294901760
        %v1163 = vsub.f32 %v1161, %v1162
        %v1164 = vand.u32 %v1163, 4294901760
        %1165 = vmatmul.mubr.f32.gmra.mrb[0].mxu0 %v1164
        %v1166 = vpop.f32.mrb[0].mxu0
        %v1167 = vadd.f32 0.0, %v1166
        %v1168 = vpop.f32.mrb[0].mxu0
        %1169 = vdwg.mxu0
        %1170 = vmatprep.subr.mxu0 0.0
        %v1171 = vand.u32 %v251, 4294901760
        %v1172 = vsub.f32 %v251, %v1171
        %v1173 = vand.u32 %v1172, 4294901760
        %v1174 = vsub.f32 %v1172, %v1173
        %v1175 = vand.u32 %v1174, 4294901760
        %1176 = vmatpush1.msra.mxu0 %v1175
        %1177 = vmatprep.subr.mxu0 0.0
        %v1178 = vand.u32 %v252, 4294901760
        %v1179 = vsub.f32 %v252, %v1178
        %v1180 = vand.u32 %v1179, 4294901760
        %v1181 = vsub.f32 %v1179, %v1180
        %v1182 = vand.u32 %v1181, 4294901760
        %1183 = vmatpush1.msra.mxu0 %v1182
        %1184 = vmatprep.subr.mxu0 0.0
        %v1185 = vand.u32 %v253, 4294901760
        %v1186 = vsub.f32 %v253, %v1185
        %v1187 = vand.u32 %v1186, 4294901760
        %v1188 = vsub.f32 %v1186, %v1187
        %v1189 = vand.u32 %v1188, 4294901760
        %1190 = vmatpush1.msra.mxu0 %v1189
        %1191 = vmatprep.subr.mxu0 0.0
        %v1192 = vand.u32 %v254, 4294901760
        %v1193 = vsub.f32 %v254, %v1192
        %v1194 = vand.u32 %v1193, 4294901760
        %v1195 = vsub.f32 %v1193, %v1194
        %v1196 = vand.u32 %v1195, 4294901760
        %1197 = vmatpush1.msra.mxu0 %v1196
        %1198 = vmatprep.subr.mxu0 0.0
        %v1199 = vand.u32 %v255, 4294901760
        %v1200 = vsub.f32 %v255, %v1199
        %v1201 = vand.u32 %v1200, 4294901760
        %v1202 = vsub.f32 %v1200, %v1201
        %v1203 = vand.u32 %v1202, 4294901760
        %1204 = vmatpush1.msra.mxu0 %v1203
        %1205 = vmatprep.subr.mxu0 0.0
        %v1206 = vand.u32 %v256, 4294901760
        %v1207 = vsub.f32 %v256, %v1206
        %v1208 = vand.u32 %v1207, 4294901760
        %v1209 = vsub.f32 %v1207, %v1208
        %v1210 = vand.u32 %v1209, 4294901760
        %1211 = vmatpush1.msra.mxu0 %v1210
        %1212 = vmatprep.subr.mxu0 0.0
        %v1213 = vand.u32 %v257, 4294901760
        %v1214 = vsub.f32 %v257, %v1213
        %v1215 = vand.u32 %v1214, 4294901760
        %v1216 = vsub.f32 %v1214, %v1215
        %v1217 = vand.u32 %v1216, 4294901760
        %1218 = vmatpush1.msra.mxu0 %v1217
        %1219 = vmatprep.subr.mxu0 0.0
        %v1220 = vand.u32 %v258, 4294901760
        %v1221 = vsub.f32 %v258, %v1220
        %v1222 = vand.u32 %v1221, 4294901760
        %v1223 = vsub.f32 %v1221, %v1222
        %v1224 = vand.u32 %v1223, 4294901760
        %1225 = vmatpush1.msra.mxu0 %v1224
        %1226 = vmatprep.subr.mxu0 0.0
        %v1227 = vand.u32 %v259, 4294901760
        %v1228 = vsub.f32 %v259, %v1227
        %v1229 = vand.u32 %v1228, 4294901760
        %v1230 = vsub.f32 %v1228, %v1229
        %v1231 = vand.u32 %v1230, 4294901760
        %1232 = vmatpush1.msra.mxu0 %v1231
        %1233 = vmatprep.subr.mxu0 0.0
        %v1234 = vand.u32 %v260, 4294901760
        %v1235 = vsub.f32 %v260, %v1234
        %v1236 = vand.u32 %v1235, 4294901760
        %v1237 = vsub.f32 %v1235, %v1236
        %v1238 = vand.u32 %v1237, 4294901760
        %1239 = vmatpush1.msra.mxu0 %v1238
        %1240 = vmatprep.subr.mxu0 0.0
        %v1241 = vand.u32 %v261, 4294901760
        %v1242 = vsub.f32 %v261, %v1241
        %v1243 = vand.u32 %v1242, 4294901760
        %v1244 = vsub.f32 %v1242, %v1243
        %v1245 = vand.u32 %v1244, 4294901760
        %1246 = vmatpush1.msra.mxu0 %v1245
        %1247 = vmatprep.subr.mxu0 0.0
        %v1248 = vand.u32 %v262, 4294901760
        %v1249 = vsub.f32 %v262, %v1248
        %v1250 = vand.u32 %v1249, 4294901760
        %v1251 = vsub.f32 %v1249, %v1250
        %v1252 = vand.u32 %v1251, 4294901760
        %1253 = vmatpush1.msra.mxu0 %v1252
        %1254 = vmatprep.subr.mxu0 0.0
        %v1255 = vand.u32 %v263, 4294901760
        %v1256 = vsub.f32 %v263, %v1255
        %v1257 = vand.u32 %v1256, 4294901760
        %v1258 = vsub.f32 %v1256, %v1257
        %v1259 = vand.u32 %v1258, 4294901760
        %1260 = vmatpush1.msra.mxu0 %v1259
        %1261 = vmatprep.subr.mxu0 0.0
        %v1262 = vand.u32 %v264, 4294901760
        %v1263 = vsub.f32 %v264, %v1262
        %v1264 = vand.u32 %v1263, 4294901760
        %v1265 = vsub.f32 %v1263, %v1264
        %v1266 = vand.u32 %v1265, 4294901760
        %1267 = vmatpush1.msra.mxu0 %v1266
        %1268 = vmatprep.subr.mxu0 0.0
        %v1269 = vand.u32 %v265, 4294901760
        %v1270 = vsub.f32 %v265, %v1269
        %v1271 = vand.u32 %v1270, 4294901760
        %v1272 = vsub.f32 %v1270, %v1271
        %v1273 = vand.u32 %v1272, 4294901760
        %1274 = vmatpush1.msra.mxu0 %v1273
        %1275 = vmatprep.subr.mxu0 0.0
        %v1276 = vand.u32 %v266, 4294901760
        %v1277 = vsub.f32 %v266, %v1276
        %v1278 = vand.u32 %v1277, 4294901760
        %v1279 = vsub.f32 %v1277, %v1278
        %v1280 = vand.u32 %v1279, 4294901760
        %1281 = vmatpush1.msra.mxu0 %v1280
        %1282 = vmatprep.subr.mxu0 0.0
        %1283 = vmatpush1.msra.mxu0 0.0
        %1284 = vmatprep.subr.mxu0 0.0
        %1285 = vmatpush1.msra.mxu0 0.0
        %1286 = vmatprep.subr.mxu0 0.0
        %1287 = vmatpush1.msra.mxu0 0.0
        %1288 = vmatprep.subr.mxu0 0.0
        %1289 = vmatpush1.msra.mxu0 0.0
        %1290 = vmatprep.subr.mxu0 0.0
        %1291 = vmatpush1.msra.mxu0 0.0
        %1292 = vmatprep.subr.mxu0 0.0
        %1293 = vmatpush1.msra.mxu0 0.0
        %1294 = vmatprep.subr.mxu0 0.0
        %1295 = vmatpush1.msra.mxu0 0.0
        %1296 = vmatprep.subr.mxu0 0.0
        %1297 = vmatpush1.msra.mxu0 0.0
        %1298 = vmatprep.subr.mxu0 0.0
        %1299 = vmatpush1.msra.mxu0 0.0
        %1300 = vmatprep.subr.mxu0 0.0
        %1301 = vmatpush1.msra.mxu0 0.0
        %1302 = vmatprep.subr.mxu0 0.0
        %1303 = vmatpush1.msra.mxu0 0.0
        %1304 = vmatprep.subr.mxu0 0.0
        %1305 = vmatpush1.msra.mxu0 0.0
        %1306 = vmatprep.subr.mxu0 0.0
        %1307 = vmatpush1.msra.mxu0 0.0
        %1308 = vmatprep.subr.mxu0 0.0
        %1309 = vmatpush1.msra.mxu0 0.0
        %1310 = vmatprep.subr.mxu0 0.0
        %1311 = vmatpush1.msra.mxu0 0.0
        %1312 = vmatprep.subr.mxu0 0.0
        %1313 = vmatpush1.msra.mxu0 0.0
        %1314 = vmatprep.mubr.f32.mxu0 0.0
        %v1315 = vand.u32 %v1045, 4294901760
        %1316 = vmatmul.mubr.f32.gmra.mrb[0].mxu0 %v1315
        %v1317 = vpop.f32.mrb[0].mxu0
        %v1318 = vadd.f32 %v1137, %v1317
        %v1319 = vpop.f32.mrb[0].mxu0
        %1320 = vmatprep.mubr.f32.mxu0 0.0
        %v1321 = vand.u32 %v1046, 4294901760
        %1322 = vmatmul.mubr.f32.gmra.mrb[0].mxu0 %v1321
        %v1323 = vpop.f32.mrb[0].mxu0
        %v1324 = vadd.f32 %v1147, %v1323
        %v1325 = vpop.f32.mrb[0].mxu0
        %1326 = vmatprep.mubr.f32.mxu0 0.0
        %v1327 = vand.u32 %v1047, 4294901760
        %1328 = vmatmul.mubr.f32.gmra.mrb[0].mxu0 %v1327
        %v1329 = vpop.f32.mrb[0].mxu0
        %v1330 = vadd.f32 %v1157, %v1329
        %v1331 = vpop.f32.mrb[0].mxu0
        %1332 = vmatprep.mubr.f32.mxu0 0.0
        %v1333 = vand.u32 %v1048, 4294901760
        %1334 = vmatmul.mubr.f32.gmra.mrb[0].mxu0 %v1333
        %v1335 = vpop.f32.mrb[0].mxu0
        %v1336 = vadd.f32 %v1167, %v1335
        %v1337 = vpop.f32.mrb[0].mxu0
        %1338 = vdwg.mxu0
        %1339 = vmatprep.subr.mxu0 0.0
        %v1340 = vand.u32 %v251, 4294901760
        %v1341 = vsub.f32 %v251, %v1340
        %1342 = vmatpush1.msra.mxu0 %v1341
        %1343 = vmatprep.subr.mxu0 0.0
        %v1344 = vand.u32 %v252, 4294901760
        %v1345 = vsub.f32 %v252, %v1344
        %1346 = vmatpush1.msra.mxu0 %v1345
        %1347 = vmatprep.subr.mxu0 0.0
        %v1348 = vand.u32 %v253, 4294901760
        %v1349 = vsub.f32 %v253, %v1348
        %1350 = vmatpush1.msra.mxu0 %v1349
        %1351 = vmatprep.subr.mxu0 0.0
        %v1352 = vand.u32 %v254, 4294901760
        %v1353 = vsub.f32 %v254, %v1352
        %1354 = vmatpush1.msra.mxu0 %v1353
        %1355 = vmatprep.subr.mxu0 0.0
        %v1356 = vand.u32 %v255, 4294901760
        %v1357 = vsub.f32 %v255, %v1356
        %1358 = vmatpush1.msra.mxu0 %v1357
        %1359 = vmatprep.subr.mxu0 0.0
        %v1360 = vand.u32 %v256, 4294901760
        %v1361 = vsub.f32 %v256, %v1360
        %1362 = vmatpush1.msra.mxu0 %v1361
        %1363 = vmatprep.subr.mxu0 0.0
        %v1364 = vand.u32 %v257, 4294901760
        %v1365 = vsub.f32 %v257, %v1364
        %1366 = vmatpush1.msra.mxu0 %v1365
        %1367 = vmatprep.subr.mxu0 0.0
        %v1368 = vand.u32 %v258, 4294901760
        %v1369 = vsub.f32 %v258, %v1368
        %1370 = vmatpush1.msra.mxu0 %v1369
        %1371 = vmatprep.subr.mxu0 0.0
        %v1372 = vand.u32 %v259, 4294901760
        %v1373 = vsub.f32 %v259, %v1372
        %1374 = vmatpush1.msra.mxu0 %v1373
        %1375 = vmatprep.subr.mxu0 0.0
        %v1376 = vand.u32 %v260, 4294901760
        %v1377 = vsub.f32 %v260, %v1376
        %1378 = vmatpush1.msra.mxu0 %v1377
        %1379 = vmatprep.subr.mxu0 0.0
        %v1380 = vand.u32 %v261, 4294901760
        %v1381 = vsub.f32 %v261, %v1380
        %1382 = vmatpush1.msra.mxu0 %v1381
        %1383 = vmatprep.subr.mxu0 0.0
        %v1384 = vand.u32 %v262, 4294901760
        %v1385 = vsub.f32 %v262, %v1384
        %1386 = vmatpush1.msra.mxu0 %v1385
        %1387 = vmatprep.subr.mxu0 0.0
        %v1388 = vand.u32 %v263, 4294901760
        %v1389 = vsub.f32 %v263, %v1388
        %1390 = vmatpush1.msra.mxu0 %v1389
        %1391 = vmatprep.subr.mxu0 0.0
        %v1392 = vand.u32 %v264, 4294901760
        %v1393 = vsub.f32 %v264, %v1392
        %1394 = vmatpush1.msra.mxu0 %v1393
        %1395 = vmatprep.subr.mxu0 0.0
        %v1396 = vand.u32 %v265, 4294901760
        %v1397 = vsub.f32 %v265, %v1396
        %1398 = vmatpush1.msra.mxu0 %v1397
        %1399 = vmatprep.subr.mxu0 0.0
        %v1400 = vand.u32 %v266, 4294901760
        %v1401 = vsub.f32 %v266, %v1400
        %1402 = vmatpush1.msra.mxu0 %v1401
        %1403 = vmatprep.subr.mxu0 0.0
        %1404 = vmatpush1.msra.mxu0 0.0
        %1405 = vmatprep.subr.mxu0 0.0
        %1406 = vmatpush1.msra.mxu0 0.0
        %1407 = vmatprep.subr.mxu0 0.0
        %1408 = vmatpush1.msra.mxu0 0.0
        %1409 = vmatprep.subr.mxu0 0.0
        %1410 = vmatpush1.msra.mxu0 0.0
        %1411 = vmatprep.subr.mxu0 0.0
        %1412 = vmatpush1.msra.mxu0 0.0
        %1413 = vmatprep.subr.mxu0 0.0
        %1414 = vmatpush1.msra.mxu0 0.0
        %1415 = vmatprep.subr.mxu0 0.0
        %1416 = vmatpush1.msra.mxu0 0.0
        %1417 = vmatprep.subr.mxu0 0.0
        %1418 = vmatpush1.msra.mxu0 0.0
        %1419 = vmatprep.subr.mxu0 0.0
        %1420 = vmatpush1.msra.mxu0 0.0
        %1421 = vmatprep.subr.mxu0 0.0
        %1422 = vmatpush1.msra.mxu0 0.0
        %1423 = vmatprep.subr.mxu0 0.0
        %1424 = vmatpush1.msra.mxu0 0.0
        %1425 = vmatprep.subr.mxu0 0.0
        %1426 = vmatpush1.msra.mxu0 0.0
        %1427 = vmatprep.subr.mxu0 0.0
        %1428 = vmatpush1.msra.mxu0 0.0
        %1429 = vmatprep.subr.mxu0 0.0
        %1430 = vmatpush1.msra.mxu0 0.0
        %1431 = vmatprep.subr.mxu0 0.0
        %1432 = vmatpush1.msra.mxu0 0.0
        %1433 = vmatprep.subr.mxu0 0.0
        %1434 = vmatpush1.msra.mxu0 0.0
        %1435 = vmatprep.mubr.f32.mxu0 0.0
        %v1436 = vand.u32 %v1045, 4294901760
        %v1437 = vsub.f32 %v1045, %v1436
        %1438 = vmatmul.mubr.f32.gmra.mrb[0].mxu0 %v1437
        %v1439 = vpop.f32.mrb[0].mxu0
        %v1440 = vadd.f32 %v1318, %v1439
        %v1441 = vpop.f32.mrb[0].mxu0
        %1442 = vmatprep.mubr.f32.mxu0 0.0
        %v1443 = vand.u32 %v1046, 4294901760
        %v1444 = vsub.f32 %v1046, %v1443
        %1445 = vmatmul.mubr.f32.gmra.mrb[0].mxu0 %v1444
        %v1446 = vpop.f32.mrb[0].mxu0
        %v1447 = vadd.f32 %v1324, %v1446
        %v1448 = vpop.f32.mrb[0].mxu0
        %1449 = vmatprep.mubr.f32.mxu0 0.0
        %v1450 = vand.u32 %v1047, 4294901760
        %v1451 = vsub.f32 %v1047, %v1450
        %1452 = vmatmul.mubr.f32.gmra.mrb[0].mxu0 %v1451
        %v1453 = vpop.f32.mrb[0].mxu0
        %v1454 = vadd.f32 %v1330, %v1453
        %v1455 = vpop.f32.mrb[0].mxu0
        %1456 = vmatprep.mubr.f32.mxu0 0.0
        %v1457 = vand.u32 %v1048, 4294901760
        %v1458 = vsub.f32 %v1048, %v1457
        %1459 = vmatmul.mubr.f32.gmra.mrb[0].mxu0 %v1458
        %v1460 = vpop.f32.mrb[0].mxu0
        %v1461 = vadd.f32 %v1336, %v1460
        %v1462 = vpop.f32.mrb[0].mxu0
        %1463 = vdwg.mxu0
        %1464 = vmatprep.subr.mxu0 0.0
        %v1465 = vand.u32 %v251, 4294901760
        %1466 = vmatpush1.msra.mxu0 %v1465
        %1467 = vmatprep.subr.mxu0 0.0
        %v1468 = vand.u32 %v252, 4294901760
        %1469 = vmatpush1.msra.mxu0 %v1468
        %1470 = vmatprep.subr.mxu0 0.0
        %v1471 = vand.u32 %v253, 4294901760
        %1472 = vmatpush1.msra.mxu0 %v1471
        %1473 = vmatprep.subr.mxu0 0.0
        %v1474 = vand.u32 %v254, 4294901760
        %1475 = vmatpush1.msra.mxu0 %v1474
        %1476 = vmatprep.subr.mxu0 0.0
        %v1477 = vand.u32 %v255, 4294901760
        %1478 = vmatpush1.msra.mxu0 %v1477
        %1479 = vmatprep.subr.mxu0 0.0
        %v1480 = vand.u32 %v256, 4294901760
        %1481 = vmatpush1.msra.mxu0 %v1480
        %1482 = vmatprep.subr.mxu0 0.0
        %v1483 = vand.u32 %v257, 4294901760
        %1484 = vmatpush1.msra.mxu0 %v1483
        %1485 = vmatprep.subr.mxu0 0.0
        %v1486 = vand.u32 %v258, 4294901760
        %1487 = vmatpush1.msra.mxu0 %v1486
        %1488 = vmatprep.subr.mxu0 0.0
        %v1489 = vand.u32 %v259, 4294901760
        %1490 = vmatpush1.msra.mxu0 %v1489
        %1491 = vmatprep.subr.mxu0 0.0
        %v1492 = vand.u32 %v260, 4294901760
        %1493 = vmatpush1.msra.mxu0 %v1492
        %1494 = vmatprep.subr.mxu0 0.0
        %v1495 = vand.u32 %v261, 4294901760
        %1496 = vmatpush1.msra.mxu0 %v1495
        %1497 = vmatprep.subr.mxu0 0.0
        %v1498 = vand.u32 %v262, 4294901760
        %1499 = vmatpush1.msra.mxu0 %v1498
        %1500 = vmatprep.subr.mxu0 0.0
        %v1501 = vand.u32 %v263, 4294901760
        %1502 = vmatpush1.msra.mxu0 %v1501
        %1503 = vmatprep.subr.mxu0 0.0
        %v1504 = vand.u32 %v264, 4294901760
        %1505 = vmatpush1.msra.mxu0 %v1504
        %1506 = vmatprep.subr.mxu0 0.0
        %v1507 = vand.u32 %v265, 4294901760
        %1508 = vmatpush1.msra.mxu0 %v1507
        %1509 = vmatprep.subr.mxu0 0.0
        %v1510 = vand.u32 %v266, 4294901760
        %1511 = vmatpush1.msra.mxu0 %v1510
        %1512 = vmatprep.subr.mxu0 0.0
        %1513 = vmatpush1.msra.mxu0 0.0
        %1514 = vmatprep.subr.mxu0 0.0
        %1515 = vmatpush1.msra.mxu0 0.0
        %1516 = vmatprep.subr.mxu0 0.0
        %1517 = vmatpush1.msra.mxu0 0.0
        %1518 = vmatprep.subr.mxu0 0.0
        %1519 = vmatpush1.msra.mxu0 0.0
        %1520 = vmatprep.subr.mxu0 0.0
        %1521 = vmatpush1.msra.mxu0 0.0
        %1522 = vmatprep.subr.mxu0 0.0
        %1523 = vmatpush1.msra.mxu0 0.0
        %1524 = vmatprep.subr.mxu0 0.0
        %1525 = vmatpush1.msra.mxu0 0.0
        %1526 = vmatprep.subr.mxu0 0.0
        %1527 = vmatpush1.msra.mxu0 0.0
        %1528 = vmatprep.subr.mxu0 0.0
        %1529 = vmatpush1.msra.mxu0 0.0
        %1530 = vmatprep.subr.mxu0 0.0
        %1531 = vmatpush1.msra.mxu0 0.0
        %1532 = vmatprep.subr.mxu0 0.0
        %1533 = vmatpush1.msra.mxu0 0.0
        %1534 = vmatprep.subr.mxu0 0.0
        %1535 = vmatpush1.msra.mxu0 0.0
        %1536 = vmatprep.subr.mxu0 0.0
        %1537 = vmatpush1.msra.mxu0 0.0
        %1538 = vmatprep.subr.mxu0 0.0
        %1539 = vmatpush1.msra.mxu0 0.0
        %1540 = vmatprep.subr.mxu0 0.0
        %1541 = vmatpush1.msra.mxu0 0.0
        %1542 = vmatprep.subr.mxu0 0.0
        %1543 = vmatpush1.msra.mxu0 0.0
        %1544 = vmatprep.mubr.f32.mxu0 0.0
        %v1545 = vand.u32 %v1045, 4294901760
        %v1546 = vsub.f32 %v1045, %v1545
        %v1547 = vand.u32 %v1546, 4294901760
        %1548 = vmatmul.mubr.f32.gmra.mrb[0].mxu0 %v1547
        %v1549 = vpop.f32.mrb[0].mxu0
        %v1550 = vadd.f32 %v1440, %v1549
        %v1551 = vpop.f32.mrb[0].mxu0
        %1552 = vmatprep.mubr.f32.mxu0 0.0
        %v1553 = vand.u32 %v1046, 4294901760
        %v1554 = vsub.f32 %v1046, %v1553
        %v1555 = vand.u32 %v1554, 4294901760
        %1556 = vmatmul.mubr.f32.gmra.mrb[0].mxu0 %v1555
        %v1557 = vpop.f32.mrb[0].mxu0
        %v1558 = vadd.f32 %v1447, %v1557
        %v1559 = vpop.f32.mrb[0].mxu0
        %1560 = vmatprep.mubr.f32.mxu0 0.0
        %v1561 = vand.u32 %v1047, 4294901760
        %v1562 = vsub.f32 %v1047, %v1561
        %v1563 = vand.u32 %v1562, 4294901760
        %1564 = vmatmul.mubr.f32.gmra.mrb[0].mxu0 %v1563
        %v1565 = vpop.f32.mrb[0].mxu0
        %v1566 = vadd.f32 %v1454, %v1565
        %v1567 = vpop.f32.mrb[0].mxu0
        %1568 = vmatprep.mubr.f32.mxu0 0.0
        %v1569 = vand.u32 %v1048, 4294901760
        %v1570 = vsub.f32 %v1048, %v1569
        %v1571 = vand.u32 %v1570, 4294901760
        %1572 = vmatmul.mubr.f32.gmra.mrb[0].mxu0 %v1571
        %v1573 = vpop.f32.mrb[0].mxu0
        %v1574 = vadd.f32 %v1461, %v1573
        %v1575 = vpop.f32.mrb[0].mxu0
        %1576 = vdwg.mxu0
        %1577 = vmatprep.subr.mxu0 0.0
        %v1578 = vand.u32 %v251, 4294901760
        %v1579 = vsub.f32 %v251, %v1578
        %v1580 = vand.u32 %v1579, 4294901760
        %1581 = vmatpush1.msra.mxu0 %v1580
        %1582 = vmatprep.subr.mxu0 0.0
        %v1583 = vand.u32 %v252, 4294901760
        %v1584 = vsub.f32 %v252, %v1583
        %v1585 = vand.u32 %v1584, 4294901760
        %1586 = vmatpush1.msra.mxu0 %v1585
        %1587 = vmatprep.subr.mxu0 0.0
        %v1588 = vand.u32 %v253, 4294901760
        %v1589 = vsub.f32 %v253, %v1588
        %v1590 = vand.u32 %v1589, 4294901760
        %1591 = vmatpush1.msra.mxu0 %v1590
        %1592 = vmatprep.subr.mxu0 0.0
        %v1593 = vand.u32 %v254, 4294901760
        %v1594 = vsub.f32 %v254, %v1593
        %v1595 = vand.u32 %v1594, 4294901760
        %1596 = vmatpush1.msra.mxu0 %v1595
        %1597 = vmatprep.subr.mxu0 0.0
        %v1598 = vand.u32 %v255, 4294901760
        %v1599 = vsub.f32 %v255, %v1598
        %v1600 = vand.u32 %v1599, 4294901760
        %1601 = vmatpush1.msra.mxu0 %v1600
        %1602 = vmatprep.subr.mxu0 0.0
        %v1603 = vand.u32 %v256, 4294901760
        %v1604 = vsub.f32 %v256, %v1603
        %v1605 = vand.u32 %v1604, 4294901760
        %1606 = vmatpush1.msra.mxu0 %v1605
        %1607 = vmatprep.subr.mxu0 0.0
        %v1608 = vand.u32 %v257, 4294901760
        %v1609 = vsub.f32 %v257, %v1608
        %v1610 = vand.u32 %v1609, 4294901760
        %1611 = vmatpush1.msra.mxu0 %v1610
        %1612 = vmatprep.subr.mxu0 0.0
        %v1613 = vand.u32 %v258, 4294901760
        %v1614 = vsub.f32 %v258, %v1613
        %v1615 = vand.u32 %v1614, 4294901760
        %1616 = vmatpush1.msra.mxu0 %v1615
        %1617 = vmatprep.subr.mxu0 0.0
        %v1618 = vand.u32 %v259, 4294901760
        %v1619 = vsub.f32 %v259, %v1618
        %v1620 = vand.u32 %v1619, 4294901760
        %1621 = vmatpush1.msra.mxu0 %v1620
        %1622 = vmatprep.subr.mxu0 0.0
        %v1623 = vand.u32 %v260, 4294901760
        %v1624 = vsub.f32 %v260, %v1623
        %v1625 = vand.u32 %v1624, 4294901760
        %1626 = vmatpush1.msra.mxu0 %v1625
        %1627 = vmatprep.subr.mxu0 0.0
        %v1628 = vand.u32 %v261, 4294901760
        %v1629 = vsub.f32 %v261, %v1628
        %v1630 = vand.u32 %v1629, 4294901760
        %1631 = vmatpush1.msra.mxu0 %v1630
        %1632 = vmatprep.subr.mxu0 0.0
        %v1633 = vand.u32 %v262, 4294901760
        %v1634 = vsub.f32 %v262, %v1633
        %v1635 = vand.u32 %v1634, 4294901760
        %1636 = vmatpush1.msra.mxu0 %v1635
        %1637 = vmatprep.subr.mxu0 0.0
        %v1638 = vand.u32 %v263, 4294901760
        %v1639 = vsub.f32 %v263, %v1638
        %v1640 = vand.u32 %v1639, 4294901760
        %1641 = vmatpush1.msra.mxu0 %v1640
        %1642 = vmatprep.subr.mxu0 0.0
        %v1643 = vand.u32 %v264, 4294901760
        %v1644 = vsub.f32 %v264, %v1643
        %v1645 = vand.u32 %v1644, 4294901760
        %1646 = vmatpush1.msra.mxu0 %v1645
        %1647 = vmatprep.subr.mxu0 0.0
        %v1648 = vand.u32 %v265, 4294901760
        %v1649 = vsub.f32 %v265, %v1648
        %v1650 = vand.u32 %v1649, 4294901760
        %1651 = vmatpush1.msra.mxu0 %v1650
        %1652 = vmatprep.subr.mxu0 0.0
        %v1653 = vand.u32 %v266, 4294901760
        %v1654 = vsub.f32 %v266, %v1653
        %v1655 = vand.u32 %v1654, 4294901760
        %1656 = vmatpush1.msra.mxu0 %v1655
        %1657 = vmatprep.subr.mxu0 0.0
        %1658 = vmatpush1.msra.mxu0 0.0
        %1659 = vmatprep.subr.mxu0 0.0
        %1660 = vmatpush1.msra.mxu0 0.0
        %1661 = vmatprep.subr.mxu0 0.0
        %1662 = vmatpush1.msra.mxu0 0.0
        %1663 = vmatprep.subr.mxu0 0.0
        %1664 = vmatpush1.msra.mxu0 0.0
        %1665 = vmatprep.subr.mxu0 0.0
        %1666 = vmatpush1.msra.mxu0 0.0
        %1667 = vmatprep.subr.mxu0 0.0
        %1668 = vmatpush1.msra.mxu0 0.0
        %1669 = vmatprep.subr.mxu0 0.0
        %1670 = vmatpush1.msra.mxu0 0.0
        %1671 = vmatprep.subr.mxu0 0.0
        %1672 = vmatpush1.msra.mxu0 0.0
        %1673 = vmatprep.subr.mxu0 0.0
        %1674 = vmatpush1.msra.mxu0 0.0
        %1675 = vmatprep.subr.mxu0 0.0
        %1676 = vmatpush1.msra.mxu0 0.0
        %1677 = vmatprep.subr.mxu0 0.0
        %1678 = vmatpush1.msra.mxu0 0.0
        %1679 = vmatprep.subr.mxu0 0.0
        %1680 = vmatpush1.msra.mxu0 0.0
        %1681 = vmatprep.subr.mxu0 0.0
        %1682 = vmatpush1.msra.mxu0 0.0
        %1683 = vmatprep.subr.mxu0 0.0
        %1684 = vmatpush1.msra.mxu0 0.0
        %1685 = vmatprep.subr.mxu0 0.0
        %1686 = vmatpush1.msra.mxu0 0.0
        %1687 = vmatprep.subr.mxu0 0.0
        %1688 = vmatpush1.msra.mxu0 0.0
        %1689 = vmatprep.mubr.f32.mxu0 0.0
        %v1690 = vand.u32 %v1045, 4294901760
        %1691 = vmatmul.mubr.f32.gmra.mrb[0].mxu0 %v1690
        %v1692 = vpop.f32.mrb[0].mxu0
        %v1693 = vadd.f32 %v1550, %v1692
        %v1694 = vpop.f32.mrb[0].mxu0
        %1695 = vmatprep.mubr.f32.mxu0 0.0
        %v1696 = vand.u32 %v1046, 4294901760
        %1697 = vmatmul.mubr.f32.gmra.mrb[0].mxu0 %v1696
        %v1698 = vpop.f32.mrb[0].mxu0
        %v1699 = vadd.f32 %v1558, %v1698
        %v1700 = vpop.f32.mrb[0].mxu0
        %1701 = vmatprep.mubr.f32.mxu0 0.0
        %v1702 = vand.u32 %v1047, 4294901760
        %1703 = vmatmul.mubr.f32.gmra.mrb[0].mxu0 %v1702
        %v1704 = vpop.f32.mrb[0].mxu0
        %v1705 = vadd.f32 %v1566, %v1704
        %v1706 = vpop.f32.mrb[0].mxu0
        %1707 = vmatprep.mubr.f32.mxu0 0.0
        %v1708 = vand.u32 %v1048, 4294901760
        %1709 = vmatmul.mubr.f32.gmra.mrb[0].mxu0 %v1708
        %v1710 = vpop.f32.mrb[0].mxu0
        %v1711 = vadd.f32 %v1574, %v1710
        %v1712 = vpop.f32.mrb[0].mxu0
        %1713 = vdwg.mxu0
        %1714 = vmatprep.subr.mxu0 0.0
        %v1715 = vand.u32 %v251, 4294901760
        %1716 = vmatpush1.msra.mxu0 %v1715
        %1717 = vmatprep.subr.mxu0 0.0
        %v1718 = vand.u32 %v252, 4294901760
        %1719 = vmatpush1.msra.mxu0 %v1718
        %1720 = vmatprep.subr.mxu0 0.0
        %v1721 = vand.u32 %v253, 4294901760
        %1722 = vmatpush1.msra.mxu0 %v1721
        %1723 = vmatprep.subr.mxu0 0.0
        %v1724 = vand.u32 %v254, 4294901760
        %1725 = vmatpush1.msra.mxu0 %v1724
        %1726 = vmatprep.subr.mxu0 0.0
        %v1727 = vand.u32 %v255, 4294901760
        %1728 = vmatpush1.msra.mxu0 %v1727
        %1729 = vmatprep.subr.mxu0 0.0
        %v1730 = vand.u32 %v256, 4294901760
        %1731 = vmatpush1.msra.mxu0 %v1730
        %1732 = vmatprep.subr.mxu0 0.0
        %v1733 = vand.u32 %v257, 4294901760
        %1734 = vmatpush1.msra.mxu0 %v1733
        %1735 = vmatprep.subr.mxu0 0.0
        %v1736 = vand.u32 %v258, 4294901760
        %1737 = vmatpush1.msra.mxu0 %v1736
        %1738 = vmatprep.subr.mxu0 0.0
        %v1739 = vand.u32 %v259, 4294901760
        %1740 = vmatpush1.msra.mxu0 %v1739
        %1741 = vmatprep.subr.mxu0 0.0
        %v1742 = vand.u32 %v260, 4294901760
        %1743 = vmatpush1.msra.mxu0 %v1742
        %1744 = vmatprep.subr.mxu0 0.0
        %v1745 = vand.u32 %v261, 4294901760
        %1746 = vmatpush1.msra.mxu0 %v1745
        %1747 = vmatprep.subr.mxu0 0.0
        %v1748 = vand.u32 %v262, 4294901760
        %1749 = vmatpush1.msra.mxu0 %v1748
        %1750 = vmatprep.subr.mxu0 0.0
        %v1751 = vand.u32 %v263, 4294901760
        %1752 = vmatpush1.msra.mxu0 %v1751
        %1753 = vmatprep.subr.mxu0 0.0
        %v1754 = vand.u32 %v264, 4294901760
        %1755 = vmatpush1.msra.mxu0 %v1754
        %1756 = vmatprep.subr.mxu0 0.0
        %v1757 = vand.u32 %v265, 4294901760
        %1758 = vmatpush1.msra.mxu0 %v1757
        %1759 = vmatprep.subr.mxu0 0.0
        %v1760 = vand.u32 %v266, 4294901760
        %1761 = vmatpush1.msra.mxu0 %v1760
        %1762 = vmatprep.subr.mxu0 0.0
        %1763 = vmatpush1.msra.mxu0 0.0
        %1764 = vmatprep.subr.mxu0 0.0
        %1765 = vmatpush1.msra.mxu0 0.0
        %1766 = vmatprep.subr.mxu0 0.0
        %1767 = vmatpush1.msra.mxu0 0.0
        %1768 = vmatprep.subr.mxu0 0.0
        %1769 = vmatpush1.msra.mxu0 0.0
        %1770 = vmatprep.subr.mxu0 0.0
        %1771 = vmatpush1.msra.mxu0 0.0
        %1772 = vmatprep.subr.mxu0 0.0
        %1773 = vmatpush1.msra.mxu0 0.0
        %1774 = vmatprep.subr.mxu0 0.0
        %1775 = vmatpush1.msra.mxu0 0.0
        %1776 = vmatprep.subr.mxu0 0.0
        %1777 = vmatpush1.msra.mxu0 0.0
        %1778 = vmatprep.subr.mxu0 0.0
        %1779 = vmatpush1.msra.mxu0 0.0
        %1780 = vmatprep.subr.mxu0 0.0
        %1781 = vmatpush1.msra.mxu0 0.0
        %1782 = vmatprep.subr.mxu0 0.0
        %1783 = vmatpush1.msra.mxu0 0.0
        %1784 = vmatprep.subr.mxu0 0.0
        %1785 = vmatpush1.msra.mxu0 0.0
        %1786 = vmatprep.subr.mxu0 0.0
        %1787 = vmatpush1.msra.mxu0 0.0
        %1788 = vmatprep.subr.mxu0 0.0
        %1789 = vmatpush1.msra.mxu0 0.0
        %1790 = vmatprep.subr.mxu0 0.0
        %1791 = vmatpush1.msra.mxu0 0.0
        %1792 = vmatprep.subr.mxu0 0.0
        %1793 = vmatpush1.msra.mxu0 0.0
        %1794 = vmatprep.mubr.f32.mxu0 0.0
        %v1795 = vand.u32 %v1045, 4294901760
        %1796 = vmatmul.mubr.f32.gmra.mrb[0].mxu0 %v1795
        %v1797 = vpop.f32.mrb[0].mxu0
        %v1798 = vadd.f32 %v1693, %v1797
        %v1799 = vpop.f32.mrb[0].mxu0
        %1800 = vmatprep.mubr.f32.mxu0 0.0
        %v1801 = vand.u32 %v1046, 4294901760
        %1802 = vmatmul.mubr.f32.gmra.mrb[0].mxu0 %v1801
        %v1803 = vpop.f32.mrb[0].mxu0
        %v1804 = vadd.f32 %v1699, %v1803
        %v1805 = vpop.f32.mrb[0].mxu0
        %1806 = vmatprep.mubr.f32.mxu0 0.0
        %v1807 = vand.u32 %v1047, 4294901760
        %1808 = vmatmul.mubr.f32.gmra.mrb[0].mxu0 %v1807
        %v1809 = vpop.f32.mrb[0].mxu0
        %v1810 = vadd.f32 %v1705, %v1809
        %v1811 = vpop.f32.mrb[0].mxu0
        %1812 = vmatprep.mubr.f32.mxu0 0.0
        %v1813 = vand.u32 %v1048, 4294901760
        %1814 = vmatmul.mubr.f32.gmra.mrb[0].mxu0 %v1813
        %v1815 = vpop.f32.mrb[0].mxu0
        %v1816 = vadd.f32 %v1711, %v1815
        %v1817 = vpop.f32.mrb[0].mxu0
        %1818 = vdwg.mxu0
        %v1819 = vmul.f32 %v1798, 0.03125
        %v1820 = vmul.f32 %v1804, 0.03125
        %v1821 = vmul.f32 %v1810, 0.03125
        %v1822 = vmul.f32 %v1816, 0.03125
        %v1823 = vadd.f32 %v1819, 1e-06
        %v1824 = vadd.f32 %v1820, 1e-06
        %v1825 = vadd.f32 %v1821, 1e-06
        %v1826 = vadd.f32 %v1822, 1e-06
        %v1827 = vrsqrt.pop %v1823
        %v1828 = vrsqrt.pop %v1824
        %v1829 = vrsqrt.pop %v1825
        %v1830 = vrsqrt.pop %v1826
        %v1831 = vmul.f32 %v1041, %v1827
        %v1832 = vmul.f32 %v1042, %v1828
        %v1833 = vmul.f32 %v1043, %v1829
        %v1834 = vmul.f32 %v1044, %v1830
        %v1835 = vld [vmem:[%s1] sm:$0x1]
        %v1836 = vld [vmem:[%s2] sm:$0x1]
        %v1838 = vlaneseq
        %v1839 = vshrl.u32 %v1838, 7
        %v1840 = vsub.s32 0, %v1839
        %v1841 = vrot.slane %v1835, %v1840
        %v1843 = vmul.f32 %v1831, %v1841
        %v1844 = vmul.f32 %v1832, %v1841
        %v1845 = vmul.f32 %v1833, %v1841
        %v1846 = vmul.f32 %v1834, %v1841
        %v1848 = vlaneseq
        %v1849 = vshrl.u32 %v1848, 7
        %v1850 = vsub.s32 0, %v1849
        %v1851 = vrot.slane %v1836, %v1850
        %v1853 = vadd.f32 %v1843, %v1851
        %v1854 = vadd.f32 %v1844, %v1851
        %v1855 = vadd.f32 %v1845, %v1851
        %v1856 = vadd.f32 %v1846, %v1851
        %1857 = vst [vmem:[%s236] sm:$0xff] %v1853
        %1858 = vst [vmem:[%s236 + $0x8] sm:$0xff] %v1854
        %1859 = vst [vmem:[%s236 + $0x10] sm:$0xff] %v1855
        %1860 = vst [vmem:[%s236 + $0x18] sm:$0xff] %v1856
        %s1861 = sand.u32 %s119, 1
        %s1862 = scalar_lea.sflag [#allocation4], %s1861
        %s1863 = sand.u32 %s119, 1
        %s1864 = smul.addr %s1863, 32
        %s1865 = scalar_lea.vmem [#allocation7], %s1864
        // Predicated region
        $region45: #{tpu_custom_call.1} parent=35 // pred_check
          %p1866 = pneg %p129
        $region46: #{tpu_custom_call.1} parent=35 // pred_check_branch
          %1868 = sbr.rel (%p1866) target = $region48
        $region47: #{tpu_custom_call.1} parent=35 // pred_region
          %s1869 = smul.u32 4, %s22
          %s1870 = ssub.s32 7, %s1869
          %p1871 = scmp.lt.s32.totalorder %s1870, 4
          %s1872 = scalar_select %p1871, %s1870, 4
          %s1873 = smul.u32 128, %s1872
          %s1875 = ssub.s32 512, %s1873
          %1876 = vsyncadd %s1862, %s1875
          %p1877 = scmp.ne.s32.totalorder 0, %s1873
          %s1878 = smul.addr %s1869, 128
          %s1879 = scalar_lea.hbm %s4, %s1878
          %s1880 = smul.u32 8, %s1872
          %s1881 = sshll.u32 %s1865, 4
          %s1882 = int_to_ptr.vmem [resolvable:$true] %s1881
          %s1883 = sshll.u32 %s1880, 4
          %1887 = dma.vmem_to_hbm [thread:$0]  (%p1877), %s1882, %s1883, %s1879, %s1862, 128, 128, 8
        $region48: #{tpu_custom_call.1} parent=35 // pred_fallthru
          _
      $region36: #{tpu_custom_call.1} parent=5 // pred_fallthru
        _
      %p1888 = scmp.le.s32.totalorder 2, %s17
      // Predicated region
      $region49: #{tpu_custom_call.1} parent=5 // pred_check
        %p1889 = pneg %p1888
      $region50: #{tpu_custom_call.1} parent=5 // pred_check_branch
        %1891 = sbr.rel (%p1889) target = $region52
      $region51: #{tpu_custom_call.1} parent=5 // pred_region
        %s1892 = ssub.s32 %s17, 2
        // Predicated region
        $region53: #{tpu_custom_call.1} parent=51 // pred_check
          %p1893 = pneg %p135
        $region54: #{tpu_custom_call.1} parent=51 // pred_check_branch
          %1895 = sbr.rel (%p1893) target = $region56
        $region55: #{tpu_custom_call.1} parent=51 // pred_region
          %s1896 = sand.u32 %s120, 1
          %s1897 = scalar_lea.sflag [#allocation4], %s1896
          %s1898 = sand.u32 %s120, 1
          %s1899 = smul.addr %s1898, 32
          %s1900 = scalar_lea.vmem [#allocation7], %s1899
          %1901 = dma.done %s1897, 512
        $region56: #{tpu_custom_call.1} parent=51 // pred_fallthru
          _
      $region52: #{tpu_custom_call.1} parent=5 // pred_fallthru
        _
    $region6: #{tpu_custom_call.1} parent=1 // loop_footer
      %s21 = sadd.s32 1, %s17
    $region7: #{tpu_custom_call.1} parent=1 // loop_footer_branch
      %16 = sbr.rel target = $region3
    $region8: #{tpu_custom_call.1} parent=1 // loop_exit
      _
    %1902 = vsyncpa [#allocation3], 1
    %s1903 = scalar_lea.sflag [#allocation3], 1
    %1904 = vsyncpa %s1903, 1
    %1905 = vsyncpa [#allocation6], 1
    %1906 = vsyncpa [#allocation4], 1
    %s1907 = scalar_lea.sflag [#allocation4], 1
    %1908 = vsyncpa %s1907, 1

</llo_original>
